<compile_context>
chip_gen: v6e
topology: v6e:2x2x1
jax: 0.10.0
libtpu: 0.0.40
codegen_flags: <defaults>
</compile_context>

<pallas_src>
import math
import functools

import jax
import jax.numpy as jnp
from jax.experimental import pallas as pl
from jax.experimental.pallas import tpu as pltpu


_LN_EPS = 1e-12                    # BERT-style LayerNorm eps (as in cate.py)


def _vmem_limit_bytes():
    """Generation-aware VMEM budget: 3/4 of capacity (96 MiB v5e/v6e, 48 MiB v7x)."""
    try:
        info = pltpu.get_tpu_info()
        cap = getattr(info, "vmem_capacity_bytes", None)
        if cap:
            return int(cap) * 3 // 4
    except Exception:
        pass
    return 48 * 1024 * 1024


_VMEM_LIMIT = _vmem_limit_bytes()


def _tile(dim, target, align):
    """Largest block size <= target that evenly tiles `dim` (or the full dim)."""
    if dim <= target:
        return dim
    t = (target // align) * align
    while t >= align:
        if dim % t == 0:
            return t
        t -= align
    return dim


def _gelu(h):
    # TODO(synk): PyTorch/CATE GELU uses exact erf; tanh approximation used here.
    return 0.5 * h * (1.0 + jnp.tanh(0.7978845608028654
                                     * (h + 0.044715 * h * h * h)))


# ----------------------------- Pallas kernels ------------------------------

def _matmul_kernel(x_ref, w_ref, b_ref, o_ref, acc_ref, *, activation):
    @pl.when(pl.program_id(2) == 0)
    def _():
        acc_ref[...] = jnp.zeros_like(acc_ref)

    acc_ref[...] += jnp.dot(x_ref[...], w_ref[...],
                            preferred_element_type=jnp.float32)

    @pl.when(pl.program_id(2) == pl.num_programs(2) - 1)
    def _():
        h = acc_ref[...] + b_ref[...].astype(jnp.float32)
        if activation == "gelu":
            h = _gelu(h)
        o_ref[...] = h.astype(o_ref.dtype)


def _matmul_add_ln_kernel(x_ref, w_ref, b_ref, r_ref, g_ref, bb_ref,
                          o_ref, acc_ref):
    # out = LayerNorm(residual + x @ w + b); full output row kept in the block.
    @pl.when(pl.program_id(1) == 0)
    def _():
        acc_ref[...] = jnp.zeros_like(acc_ref)

    acc_ref[...] += jnp.dot(x_ref[...], w_ref[...],
                            preferred_element_type=jnp.float32)

    @pl.when(pl.program_id(1) == pl.num_programs(1) - 1)
    def _():
        h = (acc_ref[...] + b_ref[...].astype(jnp.float32)
             + r_ref[...].astype(jnp.float32))
        mu = jnp.mean(h, axis=-1, keepdims=True)
        xc = h - mu
        var = jnp.mean(xc * xc, axis=-1, keepdims=True)
        y = (g_ref[...].astype(jnp.float32) * (xc * jax.lax.rsqrt(var + _LN_EPS))
             + bb_ref[...].astype(jnp.float32))
        o_ref[...] = y.astype(o_ref.dtype)


def _emb_ln_kernel(tok_ref, pos_ref, g_ref, b_ref, o_ref):
    # LayerNorm(token_embed + pos_embed); pos block comes straight from the
    # (S, D) table (no materialized (B, S, D) broadcast in HBM).
    x = tok_ref[...].astype(jnp.float32) + pos_ref[...].astype(jnp.float32)
    mu = jnp.mean(x, axis=-1, keepdims=True)
    xc = x - mu
    var = jnp.mean(xc * xc, axis=-1, keepdims=True)
    o_ref[...] = (g_ref[...].astype(jnp.float32) * (xc * jax.lax.rsqrt(var + _LN_EPS))
                  + b_ref[...].astype(jnp.float32)).astype(o_ref.dtype)


def _flash_mhsa_kernel(q_ref, k_ref, v_ref, bias_ref, o_ref,
                       m_sc, l_sc, acc_sc, *, n_heads, scale):
    # q_ref: (H, bq, dh), k_ref/v_ref: (H, bkv, dh), bias_ref: (1, bkv) f32.
    # Online-softmax across the KV grid axis (last, "arbitrary").
    kv = pl.program_id(2)

    @pl.when(kv == 0)
    def _():
        m_sc[...] = jnp.full(m_sc.shape, -jnp.inf, m_sc.dtype)
        l_sc[...] = jnp.zeros_like(l_sc)
        acc_sc[...] = jnp.zeros_like(acc_sc)

    # All heads in one batched MXU issue (leading head batch dim, no lane slicing).
    s = jnp.einsum('hqd,hkd->hqk', q_ref[...], k_ref[...],
                   preferred_element_type=jnp.float32) * scale
    s = s + bias_ref[...].astype(jnp.float32)          # (1, bkv) broadcast over (H, bq)

    m_prev = m_sc[...]
    m_new = jnp.maximum(m_prev, jnp.max(s, axis=-1, keepdims=True))
    alpha = jnp.exp(m_prev - m_new)
    p = jnp.exp(s - m_new)
    l_sc[...] = alpha * l_sc[...] + jnp.sum(p, axis=-1, keepdims=True)
    acc_sc[...] = alpha * acc_sc[...] + jnp.einsum(
        'hqk,hkd->hqd', p.astype(v_ref.dtype), v_ref[...],
        preferred_element_type=jnp.float32)
    m_sc[...] = m_new

    @pl.when(kv == pl.num_programs(2) - 1)
    def _():
        ctx = acc_sc[...] * pl.reciprocal(l_sc[...], approx=True)   # (H, bq, dh)
        # Single lane-dense (bq, D) store; head interleave happens once per q tile.
        o_ref[...] = jnp.concatenate(
            [ctx[h] for h in range(n_heads)], axis=-1).astype(o_ref.dtype)


# ----------------------------- Pallas wrappers ------------------------------

def pallas_matmul(x, w, b, activation=None, *, tm=512, tn=1024, tk=512):
    """act(x @ w + b): bf16 MXU inputs, f32 accumulation, bf16 output."""
    M, K = x.shape
    N = w.shape[1]
    bm, bn, bk = _tile(M, tm, 16), _tile(N, tn, 128), _tile(K, tk, 128)
    kern = functools.partial(_matmul_kernel, activation=activation)
    return pl.pallas_call(
        kern,
        out_shape=jax.ShapeDtypeStruct((M, N), jnp.bfloat16),
        grid=(M // bm, N // bn, K // bk),
        in_specs=[pl.BlockSpec((bm, bk), lambda i, j, k: (i, k)),
                  pl.BlockSpec((bk, bn), lambda i, j, k: (k, j)),
                  pl.BlockSpec((1, bn), lambda i, j, k: (0, j))],
        out_specs=pl.BlockSpec((bm, bn), lambda i, j, k: (i, j)),
        scratch_shapes=[pltpu.VMEM((bm, bn), jnp.float32)],
        compiler_params=pltpu.CompilerParams(
            dimension_semantics=("parallel", "parallel", "arbitrary"),
            vmem_limit_bytes=_VMEM_LIMIT),
    )(x, w, b.reshape(1, N))


def pallas_matmul_add_layernorm(x, w, b, residual, gamma, beta, *, tm=512, tk=512):
    """LayerNorm(residual + x @ w + b) with the add+LN fused into the matmul epilogue."""
    M, K = x.shape
    N = w.shape[1]
    bm, bk = _tile(M, tm, 16), _tile(K, tk, 128)
    return pl.pallas_call(
        _matmul_add_ln_kernel,
        out_shape=jax.ShapeDtypeStruct((M, N), jnp.bfloat16),
        grid=(M // bm, K // bk),
        in_specs=[pl.BlockSpec((bm, bk), lambda i, k: (i, k)),
                  pl.BlockSpec((bk, N), lambda i, k: (k, 0)),
                  pl.BlockSpec((1, N), lambda i, k: (0, 0)),
                  pl.BlockSpec((bm, N), lambda i, k: (i, 0)),
                  pl.BlockSpec((1, N), lambda i, k: (0, 0)),
                  pl.BlockSpec((1, N), lambda i, k: (0, 0))],
        out_specs=pl.BlockSpec((bm, N), lambda i, k: (i, 0)),
        scratch_shapes=[pltpu.VMEM((bm, N), jnp.float32)],
        compiler_params=pltpu.CompilerParams(
            dimension_semantics=("parallel", "arbitrary"),
            vmem_limit_bytes=_VMEM_LIMIT),
    )(x, w, b.reshape(1, N), residual, gamma.reshape(1, N), beta.reshape(1, N))


def pallas_embed_layernorm(tok, pos, gamma, beta, *, bs=512):
    """LayerNorm(tok + pos): tok (B, S, D), pos (S, D) indexed per grid step
    (no (B, S, D) broadcast materialized in HBM)."""
    B, S, D = tok.shape
    bs = _tile(S, bs, 16)
    return pl.pallas_call(
        _emb_ln_kernel,
        out_shape=jax.ShapeDtypeStruct((B, S, D), jnp.bfloat16),
        grid=(B, S // bs),
        in_specs=[pl.BlockSpec((None, bs, D), lambda b, s: (b, s, 0)),
                  pl.BlockSpec((bs, D), lambda b, s: (s, 0)),
                  pl.BlockSpec((1, D), lambda b, s: (0, 0)),
                  pl.BlockSpec((1, D), lambda b, s: (0, 0))],
        out_specs=pl.BlockSpec((None, bs, D), lambda b, s: (b, s, 0)),
        compiler_params=pltpu.CompilerParams(
            dimension_semantics=("parallel", "parallel"),
            vmem_limit_bytes=_VMEM_LIMIT),
    )(tok, pos, gamma.reshape(1, D), beta.reshape(1, D))


def pallas_attention(qkv, mask_bias, *, n_heads, bq=256, bkv=512):
    """Flash-style MHSA.

    qkv: (B, S, 3D) bf16 (fused Q|K|V projection output), mask_bias: (B, 1, S) f32
    additive key bias (0 keep / -10000 pad).  Returns ctx: (B, S, D) bf16.

    Q/K/V are split head-major once in XLA so each kernel block is a full,
    aligned (H, tile, dh) slab; scores/accumulators stay bounded in VMEM via
    online softmax over the KV grid axis.
    """
    B, S, threeD = qkv.shape
    D = threeD // 3
    dh = D // n_heads
    scale = 1.0 / math.sqrt(dh)

    qkv5 = qkv.reshape(B, S, 3, n_heads, dh)
    q = jnp.transpose(qkv5[:, :, 0], (0, 2, 1, 3))   # (B, H, S, dh)
    k = jnp.transpose(qkv5[:, :, 1], (0, 2, 1, 3))
    v = jnp.transpose(qkv5[:, :, 2], (0, 2, 1, 3))

    bq = _tile(S, bq, 16)
    bkv = _tile(S, bkv, 128)
    kern = functools.partial(_flash_mhsa_kernel, n_heads=n_heads, scale=scale)
    return pl.pallas_call(
        kern,
        out_shape=jax.ShapeDtypeStruct((B, S, D), jnp.bfloat16),
        grid=(B, S // bq, S // bkv),
        in_specs=[
            pl.BlockSpec((None, n_heads, bq, dh), lambda b, qi, ki: (b, 0, qi, 0)),
            pl.BlockSpec((None, n_heads, bkv, dh), lambda b, qi, ki: (b, 0, ki, 0)),
            pl.BlockSpec((None, n_heads, bkv, dh), lambda b, qi, ki: (b, 0, ki, 0)),
            pl.BlockSpec((None, 1, bkv), lambda b, qi, ki: (b, 0, ki)),
        ],
        out_specs=pl.BlockSpec((None, bq, D), lambda b, qi, ki: (b, qi, 0)),
        scratch_shapes=[pltpu.VMEM((n_heads, bq, 1), jnp.float32),
                        pltpu.VMEM((n_heads, bq, 1), jnp.float32),
                        pltpu.VMEM((n_heads, bq, dh), jnp.float32)],
        compiler_params=pltpu.CompilerParams(
            dimension_semantics=("parallel", "parallel", "arbitrary"),
            vmem_limit_bytes=_VMEM_LIMIT),
    )(q, k, v, mask_bias)


# --------------------------- parameters & forward ---------------------------

def init_params(key, vocab, max_len, d_model, d_ff, n_layers):
    std = 0.02
    keys = jax.random.split(key, 2 + n_layers)

    def dense(k, fan_in, fan_out):
        return (jax.random.normal(k, (fan_in, fan_out), jnp.float32) * std
                ).astype(jnp.bfloat16)

    params = {
        "tok_embed": (jax.random.normal(keys[0], (vocab, d_model), jnp.float32)
                      * std).astype(jnp.bfloat16),
        "pos_embed": (jax.random.normal(keys[1], (max_len, d_model), jnp.float32)
                      * std).astype(jnp.bfloat16),
        "emb_ln_g": jnp.ones((d_model,), jnp.float32),
        "emb_ln_b": jnp.zeros((d_model,), jnp.float32),
        "layers": [],
    }
    for l in range(n_layers):
        lk = jax.random.split(keys[2 + l], 6)
        # Fused Q|K|V projection: a single (D, 3D) weight / (3D,) bias.
        wqkv = jnp.concatenate([dense(lk[0], d_model, d_model),
                                dense(lk[1], d_model, d_model),
                                dense(lk[2], d_model, d_model)], axis=1)
        params["layers"].append({
            "wqkv": wqkv, "bqkv": jnp.zeros((3 * d_model,), jnp.float32),
            "wo": dense(lk[3], d_model, d_model), "bo": jnp.zeros((d_model,), jnp.float32),
            "ln1_g": jnp.ones((d_model,), jnp.float32), "ln1_b": jnp.zeros((d_model,), jnp.float32),
            "w1": dense(lk[4], d_model, d_ff), "b1": jnp.zeros((d_ff,), jnp.float32),
            "w2": dense(lk[5], d_ff, d_model), "b2": jnp.zeros((d_model,), jnp.float32),
            "ln2_g": jnp.ones((d_model,), jnp.float32), "ln2_b": jnp.zeros((d_model,), jnp.float32),
        })
    return params


def graph_encoder_forward(params, x_ids, mask, *, n_heads):
    """GraphEncoder.forward: concat of per-layer hidden states, (B, S, L*D)."""
    B, S = x_ids.shape
    D = params["tok_embed"].shape[1]
    # Additive key bias (1 = keep -> 0, 0 = pad -> -10000), computed once.
    mask_bias = (-10000.0 * (1.0 - mask.astype(jnp.float32))).reshape(B, 1, S)

    # Embeddings: gather stays in XLA; add + LayerNorm is a Pallas kernel that
    # reads the (S, D) position table directly (no HBM broadcast).
    tok = jnp.take(params["tok_embed"], x_ids, axis=0)                  # (B, S, D)
    pos = params["pos_embed"][:S]                                       # (S, D)
    h = pallas_embed_layernorm(tok, pos, params["emb_ln_g"], params["emb_ln_b"])
    h2 = h.reshape(B * S, D)                                            # (B*S, D) bf16

    hs = []
    for layer in params["layers"]:
        # Fused Q/K/V projection, then flash-style attention over all heads.
        qkv = pallas_matmul(h2, layer["wqkv"], layer["bqkv"])           # (B*S, 3D)
        ctx = pallas_attention(qkv.reshape(B, S, 3 * D), mask_bias,
                               n_heads=n_heads)                         # (B, S, D)

        # Output projection with fused residual-add + LayerNorm epilogue.
        h2 = pallas_matmul_add_layernorm(ctx.reshape(B * S, D), layer["wo"],
                                         layer["bo"], h2,
                                         layer["ln1_g"], layer["ln1_b"])

        # FFN: gelu matmul, then second matmul with fused residual + LayerNorm.
        ff = pallas_matmul(h2, layer["w1"], layer["b1"], activation="gelu")
        h2 = pallas_matmul_add_layernorm(ff, layer["w2"], layer["b2"], h2,
                                         layer["ln2_g"], layer["ln2_b"])

        hs.append(h2.reshape(B, S, D))

    return jnp.concatenate(hs, axis=-1).astype(jnp.float32)            # torch.cat(hs_f, -1)


# ----------------------------------- main -----------------------------------

if __name__ == "__main__":
    B, S, VOCAB, D, H, DFF, L = 2, 8, 16, 32, 4, 64, 2

    key = jax.random.PRNGKey(0)
    kp, kx = jax.random.split(key)
    params = init_params(kp, VOCAB, S, D, DFF, L)

    x_ids = jax.random.randint(kx, (B, S), 0, VOCAB, dtype=jnp.int32)
    mask = jnp.array([[1, 1, 1, 1, 1, 1, 1, 1],
                      [1, 1, 1, 1, 1, 1, 0, 0]], dtype=jnp.int32)

    fwd = jax.jit(functools.partial(graph_encoder_forward, n_heads=H))
    out = fwd(params, x_ids, mask)
    out = jax.block_until_ready(out)

    assert out.shape == (B, S, L * D), out.shape
    assert jnp.all(jnp.isfinite(out))
    print("KERNEL_OK")
</pallas_src>

<mosaic_0001>
module attributes {stable_mosaic.version = 11 : i64} {
  func.func @_matmul_kernel(%arg0: i32, %arg1: i32, %arg2: i32, %arg3: memref<16x32xbf16, #tpu.memory_space<vmem>>, %arg4: memref<32x96xbf16, #tpu.memory_space<vmem>>, %arg5: memref<1x96xf32, #tpu.memory_space<vmem>>, %arg6: memref<16x96xbf16, #tpu.memory_space<vmem>>, %arg7: memref<16x96xf32, #tpu.memory_space<vmem>>) attributes {dimension_semantics = [#tpu.dimension_semantics<parallel>, #tpu.dimension_semantics<parallel>, #tpu.dimension_semantics<arbitrary>], iteration_bounds = array<i64: 1, 1, 1>, scalar_prefetch = 0 : i64, scratch_operands = 1 : i64, tpu.core_type = #tpu.core_type<tc>, window_params = [{transform_indices = @transform_0, window_bounds = array<i64: 16, 32>}, {transform_indices = @transform_1, window_bounds = array<i64: 32, 96>}, {transform_indices = @transform_2, window_bounds = array<i64: 1, 96>}, {transform_indices = @transform_3, window_bounds = array<i64: 16, 96>}]} {
    %c0_i32 = arith.constant 0 : i32
    %0 = arith.cmpi eq, %arg2, %c0_i32 : i32
    %1 = arith.extui %0 : i1 to i32
    %c0_i32_0 = arith.constant 0 : i32
    %2 = arith.cmpi ne, %1, %c0_i32_0 : i32
    scf.if %2 {
      %cst_10 = arith.constant 0.000000e+00 : f32
      %12 = vector.broadcast %cst_10 : f32 to vector<16x96xf32>
      %c0_11 = arith.constant 0 : index
      %c0_12 = arith.constant 0 : index
      %13 = vector.load %arg7[%c0_11, %c0_12] : memref<16x96xf32, #tpu.memory_space<vmem>>, vector<16x96xf32>
      tpu.vector_store %arg7[%c0_11, %c0_12], %12 {strides = array<i32>} : memref<16x96xf32, #tpu.memory_space<vmem>>, vector<16x96xf32>,
    } else {
    }
    %c0 = arith.constant 0 : index
    %c0_1 = arith.constant 0 : index
    %3 = vector.load %arg7[%c0, %c0_1] : memref<16x96xf32, #tpu.memory_space<vmem>>, vector<16x96xf32>
    %c0_2 = arith.constant 0 : index
    %c0_3 = arith.constant 0 : index
    %4 = vector.load %arg3[%c0_2, %c0_3] : memref<16x32xbf16, #tpu.memory_space<vmem>>, vector<16x32xbf16>
    %c0_4 = arith.constant 0 : index
    %c0_5 = arith.constant 0 : index
    %5 = vector.load %arg4[%c0_4, %c0_5] : memref<32x96xbf16, #tpu.memory_space<vmem>>, vector<32x96xbf16>
    %cst = arith.constant dense<0.000000e+00> : vector<16x96xf32>
    %6 = tpu.matmul %4, %5, %cst {dimension_numbers = #tpu.dot_dimension_numbers<[1], [0], [0], [1], [0, 0, 1, 1], [], []>} : vector<16x32xbf16>, vector<32x96xbf16>, vector<16x96xf32> -> vector<16x96xf32>
    %7 = arith.addf %3, %6 : vector<16x96xf32>
    %c0_6 = arith.constant 0 : index
    %c0_7 = arith.constant 0 : index
    %8 = vector.load %arg7[%c0_6, %c0_7] : memref<16x96xf32, #tpu.memory_space<vmem>>, vector<16x96xf32>
    tpu.vector_store %arg7[%c0_6, %c0_7], %7 {strides = array<i32>} : memref<16x96xf32, #tpu.memory_space<vmem>>, vector<16x96xf32>,
    %c0_i32_8 = arith.constant 0 : i32
    %9 = arith.cmpi eq, %arg2, %c0_i32_8 : i32
    %10 = arith.extui %9 : i1 to i32
    %c0_i32_9 = arith.constant 0 : i32
    %11 = arith.cmpi ne, %10, %c0_i32_9 : i32
    scf.if %11 {
      %c0_10 = arith.constant 0 : index
      %c0_11 = arith.constant 0 : index
      %12 = vector.load %arg7[%c0_10, %c0_11] : memref<16x96xf32, #tpu.memory_space<vmem>>, vector<16x96xf32>
      %c0_12 = arith.constant 0 : index
      %c0_13 = arith.constant 0 : index
      %13 = vector.load %arg5[%c0_12, %c0_13] : memref<1x96xf32, #tpu.memory_space<vmem>>, vector<1x96xf32>
      %14 = vector.broadcast %13 : vector<1x96xf32> to vector<16x96xf32>
      %15 = arith.addf %12, %14 : vector<16x96xf32>
      %16 = arith.truncf %15 : vector<16x96xf32> to vector<16x96xbf16>
      %c0_14 = arith.constant 0 : index
      %c0_15 = arith.constant 0 : index
      %17 = vector.load %arg6[%c0_14, %c0_15] : memref<16x96xbf16, #tpu.memory_space<vmem>>, vector<16x96xbf16>
      tpu.vector_store %arg6[%c0_14, %c0_15], %16 {strides = array<i32>} : memref<16x96xbf16, #tpu.memory_space<vmem>>, vector<16x96xbf16>,
    } else {
    }
    return
  }
  func.func @transform_0(%arg0: i32, %arg1: i32, %arg2: i32) -> (i32, i32) {
    %c0_i32 = arith.constant 0 : i32
    return %arg0, %arg2 : i32, i32
  }
  func.func @transform_1(%arg0: i32, %arg1: i32, %arg2: i32) -> (i32, i32) {
    %c0_i32 = arith.constant 0 : i32
    return %arg2, %arg1 : i32, i32
  }
  func.func @transform_2(%arg0: i32, %arg1: i32, %arg2: i32) -> (i32, i32) {
    %c0_i32 = arith.constant 0 : i32
    %c0_i32_0 = arith.constant 0 : i32
    return %c0_i32, %arg1 : i32, i32
  }
  func.func @transform_3(%arg0: i32, %arg1: i32, %arg2: i32) -> (i32, i32) {
    %c0_i32 = arith.constant 0 : i32
    return %arg0, %arg1 : i32, i32
  }
}

module attributes {stable_mosaic.version = 11 : i64} {
  func.func @_emb_ln_kernel(%arg0: i32, %arg1: i32, %arg2: memref<1x8x32xbf16, #tpu.memory_space<vmem>>, %arg3: memref<8x32xbf16, #tpu.memory_space<vmem>>, %arg4: memref<1x32xf32, #tpu.memory_space<vmem>>, %arg5: memref<1x32xf32, #tpu.memory_space<vmem>>, %arg6: memref<1x8x32xbf16, #tpu.memory_space<vmem>>) attributes {dimension_semantics = [#tpu.dimension_semantics<parallel>, #tpu.dimension_semantics<parallel>], iteration_bounds = array<i64: 2, 1>, scalar_prefetch = 0 : i64, scratch_operands = 0 : i64, tpu.core_type = #tpu.core_type<tc>, window_params = [{transform_indices = @transform_0, window_bounds = array<i64: 1, 8, 32>}, {transform_indices = @transform_1, window_bounds = array<i64: 8, 32>}, {pipeline_mode = #tpu.pipeline_mode<synchronous>, transform_indices = @transform_2, window_bounds = array<i64: 1, 32>}, {pipeline_mode = #tpu.pipeline_mode<synchronous>, transform_indices = @transform_3, window_bounds = array<i64: 1, 32>}, {transform_indices = @transform_4, window_bounds = array<i64: 1, 8, 32>}]} {
    %c0 = arith.constant 0 : index
    %c0_0 = arith.constant 0 : index
    %c0_1 = arith.constant 0 : index
    %0 = vector.load %arg2[%c0, %c0_0, %c0_1] : memref<1x8x32xbf16, #tpu.memory_space<vmem>>, vector<1x8x32xbf16>
    %1 = vector.shape_cast %0 : vector<1x8x32xbf16> to vector<8x32xbf16>
    %2 = arith.extf %1 : vector<8x32xbf16> to vector<8x32xf32>
    %c0_2 = arith.constant 0 : index
    %c0_3 = arith.constant 0 : index
    %3 = vector.load %arg3[%c0_2, %c0_3] : memref<8x32xbf16, #tpu.memory_space<vmem>>, vector<8x32xbf16>
    %4 = arith.extf %3 : vector<8x32xbf16> to vector<8x32xf32>
    %5 = arith.addf %2, %4 : vector<8x32xf32>
    %cst = arith.constant dense<0.000000e+00> : vector<8xf32>
    %6 = vector.multi_reduction <add>, %5, %cst [1] : vector<8x32xf32> to vector<8xf32>
    %7 = vector.shape_cast %6 : vector<8xf32> to vector<8x1xf32>
    %cst_4 = arith.constant 3.200000e+01 : f32
    %8 = vector.broadcast %cst_4 : f32 to vector<8x1xf32>
    %9 = arith.divf %7, %8 : vector<8x1xf32>
    %10 = vector.broadcast %9 : vector<8x1xf32> to vector<8x32xf32>
    %11 = arith.subf %5, %10 : vector<8x32xf32>
    %12 = arith.mulf %11, %11 : vector<8x32xf32>
    %cst_5 = arith.constant dense<0.000000e+00> : vector<8xf32>
    %13 = vector.multi_reduction <add>, %12, %cst_5 [1] : vector<8x32xf32> to vector<8xf32>
    %14 = vector.shape_cast %13 : vector<8xf32> to vector<8x1xf32>
    %cst_6 = arith.constant 3.200000e+01 : f32
    %15 = vector.broadcast %cst_6 : f32 to vector<8x1xf32>
    %16 = arith.divf %14, %15 : vector<8x1xf32>
    %c0_7 = arith.constant 0 : index
    %c0_8 = arith.constant 0 : index
    %17 = vector.load %arg4[%c0_7, %c0_8] : memref<1x32xf32, #tpu.memory_space<vmem>>, vector<1x32xf32>
    %cst_9 = arith.constant 9.99999996E-13 : f32
    %18 = vector.broadcast %cst_9 : f32 to vector<8x1xf32>
    %19 = arith.addf %16, %18 : vector<8x1xf32>
    %20 = math.rsqrt %19 : vector<8x1xf32>
    %21 = vector.broadcast %20 : vector<8x1xf32> to vector<8x32xf32>
    %22 = arith.mulf %11, %21 : vector<8x32xf32>
    %23 = vector.broadcast %17 : vector<1x32xf32> to vector<8x32xf32>
    %24 = arith.mulf %23, %22 : vector<8x32xf32>
    %c0_10 = arith.constant 0 : index
    %c0_11 = arith.constant 0 : index
    %25 = vector.load %arg5[%c0_10, %c0_11] : memref<1x32xf32, #tpu.memory_space<vmem>>, vector<1x32xf32>
    %26 = vector.broadcast %25 : vector<1x32xf32> to vector<8x32xf32>
    %27 = arith.addf %24, %26 : vector<8x32xf32>
    %28 = arith.truncf %27 : vector<8x32xf32> to vector<8x32xbf16>
    %c0_12 = arith.constant 0 : index
    %c0_13 = arith.constant 0 : index
    %c0_14 = arith.constant 0 : index
    %29 = vector.load %arg6[%c0_12, %c0_13, %c0_14] : memref<1x8x32xbf16, #tpu.memory_space<vmem>>, vector<1x8x32xbf16>
    %30 = vector.shape_cast %29 : vector<1x8x32xbf16> to vector<8x32xbf16>
    %31 = vector.shape_cast %28 : vector<8x32xbf16> to vector<1x8x32xbf16>
    tpu.vector_store %arg6[%c0_12, %c0_13, %c0_14], %31 {strides = array<i32>} : memref<1x8x32xbf16, #tpu.memory_space<vmem>>, vector<1x8x32xbf16>,
    return
  }
  func.func @transform_0(%arg0: i32, %arg1: i32) -> (i32, i32, i32) {
    %c0_i32 = arith.constant 0 : i32
    %c0_i32_0 = arith.constant 0 : i32
    return %arg0, %arg1, %c0_i32 : i32, i32, i32
  }
  func.func @transform_1(%arg0: i32, %arg1: i32) -> (i32, i32) {
    %c0_i32 = arith.constant 0 : i32
    %c0_i32_0 = arith.constant 0 : i32
    return %arg1, %c0_i32 : i32, i32
  }
  func.func @transform_2(%arg0: i32, %arg1: i32) -> (i32, i32) {
    %c0_i32 = arith.constant 0 : i32
    %c0_i32_0 = arith.constant 0 : i32
    %c0_i32_1 = arith.constant 0 : i32
    return %c0_i32, %c0_i32_0 : i32, i32
  }
  func.func @transform_3(%arg0: i32, %arg1: i32) -> (i32, i32) {
    %c0_i32 = arith.constant 0 : i32
    %c0_i32_0 = arith.constant 0 : i32
    %c0_i32_1 = arith.constant 0 : i32
    return %c0_i32, %c0_i32_0 : i32, i32
  }
  func.func @transform_4(%arg0: i32, %arg1: i32) -> (i32, i32, i32) {
    %c0_i32 = arith.constant 0 : i32
    %c0_i32_0 = arith.constant 0 : i32
    return %arg0, %arg1, %c0_i32 : i32, i32, i32
  }
}

module attributes {stable_mosaic.version = 11 : i64} {
  func.func @_flash_mhsa_kernel(%arg0: i32, %arg1: i32, %arg2: i32, %arg3: memref<1x4x8x8xbf16, #tpu.memory_space<vmem>>, %arg4: memref<1x4x8x8xbf16, #tpu.memory_space<vmem>>, %arg5: memref<1x4x8x8xbf16, #tpu.memory_space<vmem>>, %arg6: memref<1x1x8xf32, #tpu.memory_space<vmem>>, %arg7: memref<1x8x32xbf16, #tpu.memory_space<vmem>>, %arg8: memref<4x8x1xf32, #tpu.memory_space<vmem>>, %arg9: memref<4x8x1xf32, #tpu.memory_space<vmem>>, %arg10: memref<4x8x8xf32, #tpu.memory_space<vmem>>) attributes {dimension_semantics = [#tpu.dimension_semantics<parallel>, #tpu.dimension_semantics<parallel>, #tpu.dimension_semantics<arbitrary>], iteration_bounds = array<i64: 2, 1, 1>, scalar_prefetch = 0 : i64, scratch_operands = 3 : i64, tpu.core_type = #tpu.core_type<tc>, window_params = [{transform_indices = @transform_0, window_bounds = array<i64: 1, 4, 8, 8>}, {transform_indices = @transform_1, window_bounds = array<i64: 1, 4, 8, 8>}, {transform_indices = @transform_2, window_bounds = array<i64: 1, 4, 8, 8>}, {transform_indices = @transform_3, window_bounds = array<i64: 1, 1, 8>}, {transform_indices = @transform_4, window_bounds = array<i64: 1, 8, 32>}]} {
    %c0_i32 = arith.constant 0 : i32
    %0 = arith.cmpi eq, %arg2, %c0_i32 : i32
    %1 = arith.extui %0 : i1 to i32
    %c0_i32_0 = arith.constant 0 : i32
    %2 = arith.cmpi ne, %1, %c0_i32_0 : i32
    scf.if %2 {
      %cst_39 = arith.constant 0xFF800000 : f32
      %43 = vector.broadcast %cst_39 : f32 to vector<4x8x1xf32>
      %c0_40 = arith.constant 0 : index
      %c0_41 = arith.constant 0 : index
      %c0_42 = arith.constant 0 : index
      %44 = vector.load %arg8[%c0_40, %c0_41, %c0_42] : memref<4x8x1xf32, #tpu.memory_space<vmem>>, vector<4x8x1xf32>
      tpu.vector_store %arg8[%c0_40, %c0_41, %c0_42], %43 {strides = array<i32>} : memref<4x8x1xf32, #tpu.memory_space<vmem>>, vector<4x8x1xf32>,
      %cst_43 = arith.constant 0.000000e+00 : f32
      %45 = vector.broadcast %cst_43 : f32 to vector<4x8x1xf32>
      %c0_44 = arith.constant 0 : index
      %c0_45 = arith.constant 0 : index
      %c0_46 = arith.constant 0 : index
      %46 = vector.load %arg9[%c0_44, %c0_45, %c0_46] : memref<4x8x1xf32, #tpu.memory_space<vmem>>, vector<4x8x1xf32>
      tpu.vector_store %arg9[%c0_44, %c0_45, %c0_46], %45 {strides = array<i32>} : memref<4x8x1xf32, #tpu.memory_space<vmem>>, vector<4x8x1xf32>,
      %cst_47 = arith.constant 0.000000e+00 : f32
      %47 = vector.broadcast %cst_47 : f32 to vector<4x8x8xf32>
      %c0_48 = arith.constant 0 : index
      %c0_49 = arith.constant 0 : index
      %c0_50 = arith.constant 0 : index
      %48 = vector.load %arg10[%c0_48, %c0_49, %c0_50] : memref<4x8x8xf32, #tpu.memory_space<vmem>>, vector<4x8x8xf32>
      tpu.vector_store %arg10[%c0_48, %c0_49, %c0_50], %47 {strides = array<i32>} : memref<4x8x8xf32, #tpu.memory_space<vmem>>, vector<4x8x8xf32>,
    } else {
    }
    %c0 = arith.constant 0 : index
    %c0_1 = arith.constant 0 : index
    %c0_2 = arith.constant 0 : index
    %c0_3 = arith.constant 0 : index
    %3 = vector.load %arg3[%c0, %c0_1, %c0_2, %c0_3] : memref<1x4x8x8xbf16, #tpu.memory_space<vmem>>, vector<1x4x8x8xbf16>
    %4 = vector.shape_cast %3 : vector<1x4x8x8xbf16> to vector<4x8x8xbf16>
    %c0_4 = arith.constant 0 : index
    %c0_5 = arith.constant 0 : index
    %c0_6 = arith.constant 0 : index
    %c0_7 = arith.constant 0 : index
    %5 = vector.load %arg4[%c0_4, %c0_5, %c0_6, %c0_7] : memref<1x4x8x8xbf16, #tpu.memory_space<vmem>>, vector<1x4x8x8xbf16>
    %6 = vector.shape_cast %5 : vector<1x4x8x8xbf16> to vector<4x8x8xbf16>
    "tpu.trace_start"() <{level = 10 : i32, message = "hqd,hkd->hqk"}> : () -> ()
    %cst = arith.constant dense<0.000000e+00> : vector<4x8x8xf32>
    %7 = tpu.matmul %4, %6, %cst {dimension_numbers = #tpu.dot_dimension_numbers<[2], [2], [1], [1], [0, 0, 0, 1, 1, 1], [0], [0]>} : vector<4x8x8xbf16>, vector<4x8x8xbf16>, vector<4x8x8xf32> -> vector<4x8x8xf32>
    "tpu.trace_stop"() : () -> ()
    %cst_8 = arith.constant 0.353553385 : f32
    %8 = vector.broadcast %cst_8 : f32 to vector<4x8x8xf32>
    %9 = arith.mulf %7, %8 : vector<4x8x8xf32>
    %c0_9 = arith.constant 0 : index
    %c0_10 = arith.constant 0 : index
    %c0_11 = arith.constant 0 : index
    %10 = vector.load %arg6[%c0_9, %c0_10, %c0_11] : memref<1x1x8xf32, #tpu.memory_space<vmem>>, vector<1x1x8xf32>
    %11 = vector.shape_cast %10 : vector<1x1x8xf32> to vector<1x8xf32>
    %12 = vector.shape_cast %11 : vector<1x8xf32> to vector<1x1x8xf32>
    %13 = vector.broadcast %12 : vector<1x1x8xf32> to vector<4x8x8xf32>
    %14 = arith.addf %9, %13 : vector<4x8x8xf32>
    %c0_12 = arith.constant 0 : index
    %c0_13 = arith.constant 0 : index
    %c0_14 = arith.constant 0 : index
    %15 = vector.load %arg8[%c0_12, %c0_13, %c0_14] : memref<4x8x1xf32, #tpu.memory_space<vmem>>, vector<4x8x1xf32>
    %cst_15 = arith.constant dense<0xFF800000> : vector<4x8xf32>
    %16 = vector.multi_reduction <maximumf>, %14, %cst_15 [2] : vector<4x8x8xf32> to vector<4x8xf32>
    %17 = vector.shape_cast %16 : vector<4x8xf32> to vector<4x8x1xf32>
    %18 = arith.maximumf %15, %17 : vector<4x8x1xf32>
    %19 = arith.subf %15, %18 : vector<4x8x1xf32>
    %20 = math.exp %19 : vector<4x8x1xf32>
    %21 = vector.broadcast %18 : vector<4x8x1xf32> to vector<4x8x8xf32>
    %22 = arith.subf %14, %21 : vector<4x8x8xf32>
    %23 = math.exp %22 : vector<4x8x8xf32>
    %c0_16 = arith.constant 0 : index
    %c0_17 = arith.constant 0 : index
    %c0_18 = arith.constant 0 : index
    %24 = vector.load %arg9[%c0_16, %c0_17, %c0_18] : memref<4x8x1xf32, #tpu.memory_space<vmem>>, vector<4x8x1xf32>
    %25 = arith.mulf %20, %24 : vector<4x8x1xf32>
    %cst_19 = arith.constant dense<0.000000e+00> : vector<4x8xf32>
    %26 = vector.multi_reduction <add>, %23, %cst_19 [2] : vector<4x8x8xf32> to vector<4x8xf32>
    %27 = vector.shape_cast %26 : vector<4x8xf32> to vector<4x8x1xf32>
    %28 = arith.addf %25, %27 : vector<4x8x1xf32>
    %c0_20 = arith.constant 0 : index
    %c0_21 = arith.constant 0 : index
    %c0_22 = arith.constant 0 : index
    %29 = vector.load %arg9[%c0_20, %c0_21, %c0_22] : memref<4x8x1xf32, #tpu.memory_space<vmem>>, vector<4x8x1xf32>
    tpu.vector_store %arg9[%c0_20, %c0_21, %c0_22], %28 {strides = array<i32>} : memref<4x8x1xf32, #tpu.memory_space<vmem>>, vector<4x8x1xf32>,
    %c0_23 = arith.constant 0 : index
    %c0_24 = arith.constant 0 : index
    %c0_25 = arith.constant 0 : index
    %30 = vector.load %arg10[%c0_23, %c0_24, %c0_25] : memref<4x8x8xf32, #tpu.memory_space<vmem>>, vector<4x8x8xf32>
    %31 = vector.broadcast %20 : vector<4x8x1xf32> to vector<4x8x8xf32>
    %32 = arith.mulf %31, %30 : vector<4x8x8xf32>
    %33 = arith.truncf %23 : vector<4x8x8xf32> to vector<4x8x8xbf16>
    %c0_26 = arith.constant 0 : index
    %c0_27 = arith.constant 0 : index
    %c0_28 = arith.constant 0 : index
    %c0_29 = arith.constant 0 : index
    %34 = vector.load %arg5[%c0_26, %c0_27, %c0_28, %c0_29] : memref<1x4x8x8xbf16, #tpu.memory_space<vmem>>, vector<1x4x8x8xbf16>
    %35 = vector.shape_cast %34 : vector<1x4x8x8xbf16> to vector<4x8x8xbf16>
    "tpu.trace_start"() <{level = 10 : i32, message = "hqk,hkd->hqd"}> : () -> ()
    %cst_30 = arith.constant dense<0.000000e+00> : vector<4x8x8xf32>
    %36 = tpu.matmul %33, %35, %cst_30 {dimension_numbers = #tpu.dot_dimension_numbers<[2], [1], [1], [2], [0, 0, 0, 1, 1, 2], [0], [0]>} : vector<4x8x8xbf16>, vector<4x8x8xbf16>, vector<4x8x8xf32> -> vector<4x8x8xf32>
    "tpu.trace_stop"() : () -> ()
    %37 = arith.addf %32, %36 : vector<4x8x8xf32>
    %c0_31 = arith.constant 0 : index
    %c0_32 = arith.constant 0 : index
    %c0_33 = arith.constant 0 : index
    %38 = vector.load %arg10[%c0_31, %c0_32, %c0_33] : memref<4x8x8xf32, #tpu.memory_space<vmem>>, vector<4x8x8xf32>
    tpu.vector_store %arg10[%c0_31, %c0_32, %c0_33], %37 {strides = array<i32>} : memref<4x8x8xf32, #tpu.memory_space<vmem>>, vector<4x8x8xf32>,
    %c0_34 = arith.constant 0 : index
    %c0_35 = arith.constant 0 : index
    %c0_36 = arith.constant 0 : index
    %39 = vector.load %arg8[%c0_34, %c0_35, %c0_36] : memref<4x8x1xf32, #tpu.memory_space<vmem>>, vector<4x8x1xf32>
    tpu.vector_store %arg8[%c0_34, %c0_35, %c0_36], %18 {strides = array<i32>} : memref<4x8x1xf32, #tpu.memory_space<vmem>>, vector<4x8x1xf32>,
    %c0_i32_37 = arith.constant 0 : i32
    %40 = arith.cmpi eq, %arg2, %c0_i32_37 : i32
    %41 = arith.extui %40 : i1 to i32
    %c0_i32_38 = arith.constant 0 : i32
    %42 = arith.cmpi ne, %41, %c0_i32_38 : i32
    scf.if %42 {
      %c0_39 = arith.constant 0 : index
      %c0_40 = arith.constant 0 : index
      %c0_41 = arith.constant 0 : index
      %43 = vector.load %arg10[%c0_39, %c0_40, %c0_41] : memref<4x8x8xf32, #tpu.memory_space<vmem>>, vector<4x8x8xf32>
      %c0_42 = arith.constant 0 : index
      %c0_43 = arith.constant 0 : index
      %c0_44 = arith.constant 0 : index
      %44 = vector.load %arg9[%c0_42, %c0_43, %c0_44] : memref<4x8x1xf32, #tpu.memory_space<vmem>>, vector<4x8x1xf32>
      %45 = tpu.reciprocal %44 {approx = true} : vector<4x8x1xf32> -> vector<4x8x1xf32>
      %46 = vector.broadcast %45 : vector<4x8x1xf32> to vector<4x8x8xf32>
      %47 = arith.mulf %43, %46 : vector<4x8x8xf32>
      %48 = vector.extract_strided_slice %47 {offsets = [0, 0, 0], sizes = [1, 8, 8], strides = [1, 1, 1]} : vector<4x8x8xf32> to vector<1x8x8xf32>
      %49 = vector.shape_cast %48 : vector<1x8x8xf32> to vector<8x8xf32>
      %50 = vector.extract_strided_slice %47 {offsets = [1, 0, 0], sizes = [1, 8, 8], strides = [1, 1, 1]} : vector<4x8x8xf32> to vector<1x8x8xf32>
      %51 = vector.shape_cast %50 : vector<1x8x8xf32> to vector<8x8xf32>
      %52 = vector.extract_strided_slice %47 {offsets = [2, 0, 0], sizes = [1, 8, 8], strides = [1, 1, 1]} : vector<4x8x8xf32> to vector<1x8x8xf32>
      %53 = vector.shape_cast %52 : vector<1x8x8xf32> to vector<8x8xf32>
      %54 = vector.extract_strided_slice %47 {offsets = [3, 0, 0], sizes = [1, 8, 8], strides = [1, 1, 1]} : vector<4x8x8xf32> to vector<1x8x8xf32>
      %55 = vector.shape_cast %54 : vector<1x8x8xf32> to vector<8x8xf32>
      %56 = tpu.concatenate %49, %51, %53, %55 in 1 : vector<8x8xf32>, vector<8x8xf32>, vector<8x8xf32>, vector<8x8xf32> -> vector<8x32xf32>
      %57 = arith.truncf %56 : vector<8x32xf32> to vector<8x32xbf16>
      %c0_45 = arith.constant 0 : index
      %c0_46 = arith.constant 0 : index
      %c0_47 = arith.constant 0 : index
      %58 = vector.load %arg7[%c0_45, %c0_46, %c0_47] : memref<1x8x32xbf16, #tpu.memory_space<vmem>>, vector<1x8x32xbf16>
      %59 = vector.shape_cast %58 : vector<1x8x32xbf16> to vector<8x32xbf16>
      %60 = vector.shape_cast %57 : vector<8x32xbf16> to vector<1x8x32xbf16>
      tpu.vector_store %arg7[%c0_45, %c0_46, %c0_47], %60 {strides = array<i32>} : memref<1x8x32xbf16, #tpu.memory_space<vmem>>, vector<1x8x32xbf16>,
    } else {
    }
    return
  }
  func.func @transform_0(%arg0: i32, %arg1: i32, %arg2: i32) -> (i32, i32, i32, i32) {
    %c0_i32 = arith.constant 0 : i32
    %c0_i32_0 = arith.constant 0 : i32
    %c0_i32_1 = arith.constant 0 : i32
    return %arg0, %c0_i32, %arg1, %c0_i32_0 : i32, i32, i32, i32
  }
  func.func @transform_1(%arg0: i32, %arg1: i32, %arg2: i32) -> (i32, i32, i32, i32) {
    %c0_i32 = arith.constant 0 : i32
    %c0_i32_0 = arith.constant 0 : i32
    %c0_i32_1 = arith.constant 0 : i32
    return %arg0, %c0_i32, %arg2, %c0_i32_0 : i32, i32, i32, i32
  }
  func.func @transform_2(%arg0: i32, %arg1: i32, %arg2: i32) -> (i32, i32, i32, i32) {
    %c0_i32 = arith.constant 0 : i32
    %c0_i32_0 = arith.constant 0 : i32
    %c0_i32_1 = arith.constant 0 : i32
    return %arg0, %c0_i32, %arg2, %c0_i32_0 : i32, i32, i32, i32
  }
  func.func @transform_3(%arg0: i32, %arg1: i32, %arg2: i32) -> (i32, i32, i32) {
    %c0_i32 = arith.constant 0 : i32
    %c0_i32_0 = arith.constant 0 : i32
    return %arg0, %c0_i32, %arg2 : i32, i32, i32
  }
  func.func @transform_4(%arg0: i32, %arg1: i32, %arg2: i32) -> (i32, i32, i32) {
    %c0_i32 = arith.constant 0 : i32
    %c0_i32_0 = arith.constant 0 : i32
    return %arg0, %arg1, %c0_i32 : i32, i32, i32
  }
}

module attributes {stable_mosaic.version = 11 : i64} {
  func.func @_matmul_add_ln_kernel(%arg0: i32, %arg1: i32, %arg2: memref<16x32xbf16, #tpu.memory_space<vmem>>, %arg3: memref<32x32xbf16, #tpu.memory_space<vmem>>, %arg4: memref<1x32xf32, #tpu.memory_space<vmem>>, %arg5: memref<16x32xbf16, #tpu.memory_space<vmem>>, %arg6: memref<1x32xf32, #tpu.memory_space<vmem>>, %arg7: memref<1x32xf32, #tpu.memory_space<vmem>>, %arg8: memref<16x32xbf16, #tpu.memory_space<vmem>>, %arg9: memref<16x32xf32, #tpu.memory_space<vmem>>) attributes {dimension_semantics = [#tpu.dimension_semantics<parallel>, #tpu.dimension_semantics<arbitrary>], iteration_bounds = array<i64: 1, 1>, scalar_prefetch = 0 : i64, scratch_operands = 1 : i64, tpu.core_type = #tpu.core_type<tc>, window_params = [{transform_indices = @transform_0, window_bounds = array<i64: 16, 32>}, {transform_indices = @transform_1, window_bounds = array<i64: 32, 32>}, {pipeline_mode = #tpu.pipeline_mode<synchronous>, transform_indices = @transform_2, window_bounds = array<i64: 1, 32>}, {transform_indices = @transform_3, window_bounds = array<i64: 16, 32>}, {pipeline_mode = #tpu.pipeline_mode<synchronous>, transform_indices = @transform_4, window_bounds = array<i64: 1, 32>}, {pipeline_mode = #tpu.pipeline_mode<synchronous>, transform_indices = @transform_5, window_bounds = array<i64: 1, 32>}, {transform_indices = @transform_6, window_bounds = array<i64: 16, 32>}]} {
    %c0_i32 = arith.constant 0 : i32
    %0 = arith.cmpi eq, %arg1, %c0_i32 : i32
    %1 = arith.extui %0 : i1 to i32
    %c0_i32_0 = arith.constant 0 : i32
    %2 = arith.cmpi ne, %1, %c0_i32_0 : i32
    scf.if %2 {
      %cst_10 = arith.constant 0.000000e+00 : f32
      %12 = vector.broadcast %cst_10 : f32 to vector<16x32xf32>
      %c0_11 = arith.constant 0 : index
      %c0_12 = arith.constant 0 : index
      %13 = vector.load %arg9[%c0_11, %c0_12] : memref<16x32xf32, #tpu.memory_space<vmem>>, vector<16x32xf32>
      tpu.vector_store %arg9[%c0_11, %c0_12], %12 {strides = array<i32>} : memref<16x32xf32, #tpu.memory_space<vmem>>, vector<16x32xf32>,
    } else {
    }
    %c0 = arith.constant 0 : index
    %c0_1 = arith.constant 0 : index
    %3 = vector.load %arg9[%c0, %c0_1] : memref<16x32xf32, #tpu.memory_space<vmem>>, vector<16x32xf32>
    %c0_2 = arith.constant 0 : index
    %c0_3 = arith.constant 0 : index
    %4 = vector.load %arg2[%c0_2, %c0_3] : memref<16x32xbf16, #tpu.memory_space<vmem>>, vector<16x32xbf16>
    %c0_4 = arith.constant 0 : index
    %c0_5 = arith.constant 0 : index
    %5 = vector.load %arg3[%c0_4, %c0_5] : memref<32x32xbf16, #tpu.memory_space<vmem>>, vector<32x32xbf16>
    %cst = arith.constant dense<0.000000e+00> : vector<16x32xf32>
    %6 = tpu.matmul %4, %5, %cst {dimension_numbers = #tpu.dot_dimension_numbers<[1], [0], [0], [1], [0, 0, 1, 1], [], []>} : vector<16x32xbf16>, vector<32x32xbf16>, vector<16x32xf32> -> vector<16x32xf32>
    %7 = arith.addf %3, %6 : vector<16x32xf32>
    %c0_6 = arith.constant 0 : index
    %c0_7 = arith.constant 0 : index
    %8 = vector.load %arg9[%c0_6, %c0_7] : memref<16x32xf32, #tpu.memory_space<vmem>>, vector<16x32xf32>
    tpu.vector_store %arg9[%c0_6, %c0_7], %7 {strides = array<i32>} : memref<16x32xf32, #tpu.memory_space<vmem>>, vector<16x32xf32>,
    %c0_i32_8 = arith.constant 0 : i32
    %9 = arith.cmpi eq, %arg1, %c0_i32_8 : i32
    %10 = arith.extui %9 : i1 to i32
    %c0_i32_9 = arith.constant 0 : i32
    %11 = arith.cmpi ne, %10, %c0_i32_9 : i32
    scf.if %11 {
      %c0_10 = arith.constant 0 : index
      %c0_11 = arith.constant 0 : index
      %12 = vector.load %arg9[%c0_10, %c0_11] : memref<16x32xf32, #tpu.memory_space<vmem>>, vector<16x32xf32>
      %c0_12 = arith.constant 0 : index
      %c0_13 = arith.constant 0 : index
      %13 = vector.load %arg4[%c0_12, %c0_13] : memref<1x32xf32, #tpu.memory_space<vmem>>, vector<1x32xf32>
      %14 = vector.broadcast %13 : vector<1x32xf32> to vector<16x32xf32>
      %15 = arith.addf %12, %14 : vector<16x32xf32>
      %c0_14 = arith.constant 0 : index
      %c0_15 = arith.constant 0 : index
      %16 = vector.load %arg5[%c0_14, %c0_15] : memref<16x32xbf16, #tpu.memory_space<vmem>>, vector<16x32xbf16>
      %17 = arith.extf %16 : vector<16x32xbf16> to vector<16x32xf32>
      %18 = arith.addf %15, %17 : vector<16x32xf32>
      %cst_16 = arith.constant dense<0.000000e+00> : vector<16xf32>
      %19 = vector.multi_reduction <add>, %18, %cst_16 [1] : vector<16x32xf32> to vector<16xf32>
      %20 = vector.shape_cast %19 : vector<16xf32> to vector<16x1xf32>
      %cst_17 = arith.constant 3.200000e+01 : f32
      %21 = vector.broadcast %cst_17 : f32 to vector<16x1xf32>
      %22 = arith.divf %20, %21 : vector<16x1xf32>
      %23 = vector.broadcast %22 : vector<16x1xf32> to vector<16x32xf32>
      %24 = arith.subf %18, %23 : vector<16x32xf32>
      %25 = arith.mulf %24, %24 : vector<16x32xf32>
      %cst_18 = arith.constant dense<0.000000e+00> : vector<16xf32>
      %26 = vector.multi_reduction <add>, %25, %cst_18 [1] : vector<16x32xf32> to vector<16xf32>
      %27 = vector.shape_cast %26 : vector<16xf32> to vector<16x1xf32>
      %cst_19 = arith.constant 3.200000e+01 : f32
      %28 = vector.broadcast %cst_19 : f32 to vector<16x1xf32>
      %29 = arith.divf %27, %28 : vector<16x1xf32>
      %c0_20 = arith.constant 0 : index
      %c0_21 = arith.constant 0 : index
      %30 = vector.load %arg6[%c0_20, %c0_21] : memref<1x32xf32, #tpu.memory_space<vmem>>, vector<1x32xf32>
      %cst_22 = arith.constant 9.99999996E-13 : f32
      %31 = vector.broadcast %cst_22 : f32 to vector<16x1xf32>
      %32 = arith.addf %29, %31 : vector<16x1xf32>
      %33 = math.rsqrt %32 : vector<16x1xf32>
      %34 = vector.broadcast %33 : vector<16x1xf32> to vector<16x32xf32>
      %35 = arith.mulf %24, %34 : vector<16x32xf32>
      %36 = vector.broadcast %30 : vector<1x32xf32> to vector<16x32xf32>
      %37 = arith.mulf %36, %35 : vector<16x32xf32>
      %c0_23 = arith.constant 0 : index
      %c0_24 = arith.constant 0 : index
      %38 = vector.load %arg7[%c0_23, %c0_24] : memref<1x32xf32, #tpu.memory_space<vmem>>, vector<1x32xf32>
      %39 = vector.broadcast %38 : vector<1x32xf32> to vector<16x32xf32>
      %40 = arith.addf %37, %39 : vector<16x32xf32>
      %41 = arith.truncf %40 : vector<16x32xf32> to vector<16x32xbf16>
      %c0_25 = arith.constant 0 : index
      %c0_26 = arith.constant 0 : index
      %42 = vector.load %arg8[%c0_25, %c0_26] : memref<16x32xbf16, #tpu.memory_space<vmem>>, vector<16x32xbf16>
      tpu.vector_store %arg8[%c0_25, %c0_26], %41 {strides = array<i32>} : memref<16x32xbf16, #tpu.memory_space<vmem>>, vector<16x32xbf16>,
    } else {
    }
    return
  }
  func.func @transform_0(%arg0: i32, %arg1: i32) -> (i32, i32) {
    %c0_i32 = arith.constant 0 : i32
    return %arg0, %arg1 : i32, i32
  }
  func.func @transform_1(%arg0: i32, %arg1: i32) -> (i32, i32) {
    %c0_i32 = arith.constant 0 : i32
    %c0_i32_0 = arith.constant 0 : i32
    return %arg1, %c0_i32 : i32, i32
  }
  func.func @transform_2(%arg0: i32, %arg1: i32) -> (i32, i32) {
    %c0_i32 = arith.constant 0 : i32
    %c0_i32_0 = arith.constant 0 : i32
    %c0_i32_1 = arith.constant 0 : i32
    return %c0_i32, %c0_i32_0 : i32, i32
  }
  func.func @transform_3(%arg0: i32, %arg1: i32) -> (i32, i32) {
    %c0_i32 = arith.constant 0 : i32
    %c0_i32_0 = arith.constant 0 : i32
    return %arg0, %c0_i32 : i32, i32
  }
  func.func @transform_4(%arg0: i32, %arg1: i32) -> (i32, i32) {
    %c0_i32 = arith.constant 0 : i32
    %c0_i32_0 = arith.constant 0 : i32
    %c0_i32_1 = arith.constant 0 : i32
    return %c0_i32, %c0_i32_0 : i32, i32
  }
  func.func @transform_5(%arg0: i32, %arg1: i32) -> (i32, i32) {
    %c0_i32 = arith.constant 0 : i32
    %c0_i32_0 = arith.constant 0 : i32
    %c0_i32_1 = arith.constant 0 : i32
    return %c0_i32, %c0_i32_0 : i32, i32
  }
  func.func @transform_6(%arg0: i32, %arg1: i32) -> (i32, i32) {
    %c0_i32 = arith.constant 0 : i32
    %c0_i32_0 = arith.constant 0 : i32
    return %arg0, %c0_i32 : i32, i32
  }
}

module attributes {stable_mosaic.version = 11 : i64} {
  func.func @_matmul_kernel(%arg0: i32, %arg1: i32, %arg2: i32, %arg3: memref<16x32xbf16, #tpu.memory_space<vmem>>, %arg4: memref<32x64xbf16, #tpu.memory_space<vmem>>, %arg5: memref<1x64xf32, #tpu.memory_space<vmem>>, %arg6: memref<16x64xbf16, #tpu.memory_space<vmem>>, %arg7: memref<16x64xf32, #tpu.memory_space<vmem>>) attributes {dimension_semantics = [#tpu.dimension_semantics<parallel>, #tpu.dimension_semantics<parallel>, #tpu.dimension_semantics<arbitrary>], iteration_bounds = array<i64: 1, 1, 1>, scalar_prefetch = 0 : i64, scratch_operands = 1 : i64, tpu.core_type = #tpu.core_type<tc>, window_params = [{transform_indices = @transform_0, window_bounds = array<i64: 16, 32>}, {transform_indices = @transform_1, window_bounds = array<i64: 32, 64>}, {transform_indices = @transform_2, window_bounds = array<i64: 1, 64>}, {transform_indices = @transform_3, window_bounds = array<i64: 16, 64>}]} {
    %c0_i32 = arith.constant 0 : i32
    %0 = arith.cmpi eq, %arg2, %c0_i32 : i32
    %1 = arith.extui %0 : i1 to i32
    %c0_i32_0 = arith.constant 0 : i32
    %2 = arith.cmpi ne, %1, %c0_i32_0 : i32
    scf.if %2 {
      %cst_10 = arith.constant 0.000000e+00 : f32
      %12 = vector.broadcast %cst_10 : f32 to vector<16x64xf32>
      %c0_11 = arith.constant 0 : index
      %c0_12 = arith.constant 0 : index
      %13 = vector.load %arg7[%c0_11, %c0_12] : memref<16x64xf32, #tpu.memory_space<vmem>>, vector<16x64xf32>
      tpu.vector_store %arg7[%c0_11, %c0_12], %12 {strides = array<i32>} : memref<16x64xf32, #tpu.memory_space<vmem>>, vector<16x64xf32>,
    } else {
    }
    %c0 = arith.constant 0 : index
    %c0_1 = arith.constant 0 : index
    %3 = vector.load %arg7[%c0, %c0_1] : memref<16x64xf32, #tpu.memory_space<vmem>>, vector<16x64xf32>
    %c0_2 = arith.constant 0 : index
    %c0_3 = arith.constant 0 : index
    %4 = vector.load %arg3[%c0_2, %c0_3] : memref<16x32xbf16, #tpu.memory_space<vmem>>, vector<16x32xbf16>
    %c0_4 = arith.constant 0 : index
    %c0_5 = arith.constant 0 : index
    %5 = vector.load %arg4[%c0_4, %c0_5] : memref<32x64xbf16, #tpu.memory_space<vmem>>, vector<32x64xbf16>
    %cst = arith.constant dense<0.000000e+00> : vector<16x64xf32>
    %6 = tpu.matmul %4, %5, %cst {dimension_numbers = #tpu.dot_dimension_numbers<[1], [0], [0], [1], [0, 0, 1, 1], [], []>} : vector<16x32xbf16>, vector<32x64xbf16>, vector<16x64xf32> -> vector<16x64xf32>
    %7 = arith.addf %3, %6 : vector<16x64xf32>
    %c0_6 = arith.constant 0 : index
    %c0_7 = arith.constant 0 : index
    %8 = vector.load %arg7[%c0_6, %c0_7] : memref<16x64xf32, #tpu.memory_space<vmem>>, vector<16x64xf32>
    tpu.vector_store %arg7[%c0_6, %c0_7], %7 {strides = array<i32>} : memref<16x64xf32, #tpu.memory_space<vmem>>, vector<16x64xf32>,
    %c0_i32_8 = arith.constant 0 : i32
    %9 = arith.cmpi eq, %arg2, %c0_i32_8 : i32
    %10 = arith.extui %9 : i1 to i32
    %c0_i32_9 = arith.constant 0 : i32
    %11 = arith.cmpi ne, %10, %c0_i32_9 : i32
    scf.if %11 {
      %c0_10 = arith.constant 0 : index
      %c0_11 = arith.constant 0 : index
      %12 = vector.load %arg7[%c0_10, %c0_11] : memref<16x64xf32, #tpu.memory_space<vmem>>, vector<16x64xf32>
      %c0_12 = arith.constant 0 : index
      %c0_13 = arith.constant 0 : index
      %13 = vector.load %arg5[%c0_12, %c0_13] : memref<1x64xf32, #tpu.memory_space<vmem>>, vector<1x64xf32>
      %14 = vector.broadcast %13 : vector<1x64xf32> to vector<16x64xf32>
      %15 = arith.addf %12, %14 : vector<16x64xf32>
      %cst_14 = arith.constant 5.000000e-01 : f32
      %16 = vector.broadcast %cst_14 : f32 to vector<16x64xf32>
      %17 = arith.mulf %16, %15 : vector<16x64xf32>
      %cst_15 = arith.constant 4.471500e-02 : f32
      %18 = vector.broadcast %cst_15 : f32 to vector<16x64xf32>
      %19 = arith.mulf %18, %15 : vector<16x64xf32>
      %20 = arith.mulf %19, %15 : vector<16x64xf32>
      %21 = arith.mulf %20, %15 : vector<16x64xf32>
      %22 = arith.addf %15, %21 : vector<16x64xf32>
      %cst_16 = arith.constant 0.797884583 : f32
      %23 = vector.broadcast %cst_16 : f32 to vector<16x64xf32>
      %24 = arith.mulf %23, %22 : vector<16x64xf32>
      %25 = math.tanh %24 : vector<16x64xf32>
      %cst_17 = arith.constant 1.000000e+00 : f32
      %26 = vector.broadcast %cst_17 : f32 to vector<16x64xf32>
      %27 = arith.addf %26, %25 : vector<16x64xf32>
      %28 = arith.mulf %17, %27 : vector<16x64xf32>
      %29 = arith.truncf %28 : vector<16x64xf32> to vector<16x64xbf16>
      %c0_18 = arith.constant 0 : index
      %c0_19 = arith.constant 0 : index
      %30 = vector.load %arg6[%c0_18, %c0_19] : memref<16x64xbf16, #tpu.memory_space<vmem>>, vector<16x64xbf16>
      tpu.vector_store %arg6[%c0_18, %c0_19], %29 {strides = array<i32>} : memref<16x64xbf16, #tpu.memory_space<vmem>>, vector<16x64xbf16>,
    } else {
    }
    return
  }
  func.func @transform_0(%arg0: i32, %arg1: i32, %arg2: i32) -> (i32, i32) {
    %c0_i32 = arith.constant 0 : i32
    return %arg0, %arg2 : i32, i32
  }
  func.func @transform_1(%arg0: i32, %arg1: i32, %arg2: i32) -> (i32, i32) {
    %c0_i32 = arith.constant 0 : i32
    return %arg2, %arg1 : i32, i32
  }
  func.func @transform_2(%arg0: i32, %arg1: i32, %arg2: i32) -> (i32, i32) {
    %c0_i32 = arith.constant 0 : i32
    %c0_i32_0 = arith.constant 0 : i32
    return %c0_i32, %arg1 : i32, i32
  }
  func.func @transform_3(%arg0: i32, %arg1: i32, %arg2: i32) -> (i32, i32) {
    %c0_i32 = arith.constant 0 : i32
    return %arg0, %arg1 : i32, i32
  }
}

module attributes {stable_mosaic.version = 11 : i64} {
  func.func @_matmul_add_ln_kernel(%arg0: i32, %arg1: i32, %arg2: memref<16x64xbf16, #tpu.memory_space<vmem>>, %arg3: memref<64x32xbf16, #tpu.memory_space<vmem>>, %arg4: memref<1x32xf32, #tpu.memory_space<vmem>>, %arg5: memref<16x32xbf16, #tpu.memory_space<vmem>>, %arg6: memref<1x32xf32, #tpu.memory_space<vmem>>, %arg7: memref<1x32xf32, #tpu.memory_space<vmem>>, %arg8: memref<16x32xbf16, #tpu.memory_space<vmem>>, %arg9: memref<16x32xf32, #tpu.memory_space<vmem>>) attributes {dimension_semantics = [#tpu.dimension_semantics<parallel>, #tpu.dimension_semantics<arbitrary>], iteration_bounds = array<i64: 1, 1>, scalar_prefetch = 0 : i64, scratch_operands = 1 : i64, tpu.core_type = #tpu.core_type<tc>, window_params = [{transform_indices = @transform_0, window_bounds = array<i64: 16, 64>}, {transform_indices = @transform_1, window_bounds = array<i64: 64, 32>}, {pipeline_mode = #tpu.pipeline_mode<synchronous>, transform_indices = @transform_2, window_bounds = array<i64: 1, 32>}, {transform_indices = @transform_3, window_bounds = array<i64: 16, 32>}, {pipeline_mode = #tpu.pipeline_mode<synchronous>, transform_indices = @transform_4, window_bounds = array<i64: 1, 32>}, {pipeline_mode = #tpu.pipeline_mode<synchronous>, transform_indices = @transform_5, window_bounds = array<i64: 1, 32>}, {transform_indices = @transform_6, window_bounds = array<i64: 16, 32>}]} {
    %c0_i32 = arith.constant 0 : i32
    %0 = arith.cmpi eq, %arg1, %c0_i32 : i32
    %1 = arith.extui %0 : i1 to i32
    %c0_i32_0 = arith.constant 0 : i32
    %2 = arith.cmpi ne, %1, %c0_i32_0 : i32
    scf.if %2 {
      %cst_10 = arith.constant 0.000000e+00 : f32
      %12 = vector.broadcast %cst_10 : f32 to vector<16x32xf32>
      %c0_11 = arith.constant 0 : index
      %c0_12 = arith.constant 0 : index
      %13 = vector.load %arg9[%c0_11, %c0_12] : memref<16x32xf32, #tpu.memory_space<vmem>>, vector<16x32xf32>
      tpu.vector_store %arg9[%c0_11, %c0_12], %12 {strides = array<i32>} : memref<16x32xf32, #tpu.memory_space<vmem>>, vector<16x32xf32>,
    } else {
    }
    %c0 = arith.constant 0 : index
    %c0_1 = arith.constant 0 : index
    %3 = vector.load %arg9[%c0, %c0_1] : memref<16x32xf32, #tpu.memory_space<vmem>>, vector<16x32xf32>
    %c0_2 = arith.constant 0 : index
    %c0_3 = arith.constant 0 : index
    %4 = vector.load %arg2[%c0_2, %c0_3] : memref<16x64xbf16, #tpu.memory_space<vmem>>, vector<16x64xbf16>
    %c0_4 = arith.constant 0 : index
    %c0_5 = arith.constant 0 : index
    %5 = vector.load %arg3[%c0_4, %c0_5] : memref<64x32xbf16, #tpu.memory_space<vmem>>, vector<64x32xbf16>
    %cst = arith.constant dense<0.000000e+00> : vector<16x32xf32>
    %6 = tpu.matmul %4, %5, %cst {dimension_numbers = #tpu.dot_dimension_numbers<[1], [0], [0], [1], [0, 0, 1, 1], [], []>} : vector<16x64xbf16>, vector<64x32xbf16>, vector<16x32xf32> -> vector<16x32xf32>
    %7 = arith.addf %3, %6 : vector<16x32xf32>
    %c0_6 = arith.constant 0 : index
    %c0_7 = arith.constant 0 : index
    %8 = vector.load %arg9[%c0_6, %c0_7] : memref<16x32xf32, #tpu.memory_space<vmem>>, vector<16x32xf32>
    tpu.vector_store %arg9[%c0_6, %c0_7], %7 {strides = array<i32>} : memref<16x32xf32, #tpu.memory_space<vmem>>, vector<16x32xf32>,
    %c0_i32_8 = arith.constant 0 : i32
    %9 = arith.cmpi eq, %arg1, %c0_i32_8 : i32
    %10 = arith.extui %9 : i1 to i32
    %c0_i32_9 = arith.constant 0 : i32
    %11 = arith.cmpi ne, %10, %c0_i32_9 : i32
    scf.if %11 {
      %c0_10 = arith.constant 0 : index
      %c0_11 = arith.constant 0 : index
      %12 = vector.load %arg9[%c0_10, %c0_11] : memref<16x32xf32, #tpu.memory_space<vmem>>, vector<16x32xf32>
      %c0_12 = arith.constant 0 : index
      %c0_13 = arith.constant 0 : index
      %13 = vector.load %arg4[%c0_12, %c0_13] : memref<1x32xf32, #tpu.memory_space<vmem>>, vector<1x32xf32>
      %14 = vector.broadcast %13 : vector<1x32xf32> to vector<16x32xf32>
      %15 = arith.addf %12, %14 : vector<16x32xf32>
      %c0_14 = arith.constant 0 : index
      %c0_15 = arith.constant 0 : index
      %16 = vector.load %arg5[%c0_14, %c0_15] : memref<16x32xbf16, #tpu.memory_space<vmem>>, vector<16x32xbf16>
      %17 = arith.extf %16 : vector<16x32xbf16> to vector<16x32xf32>
      %18 = arith.addf %15, %17 : vector<16x32xf32>
      %cst_16 = arith.constant dense<0.000000e+00> : vector<16xf32>
      %19 = vector.multi_reduction <add>, %18, %cst_16 [1] : vector<16x32xf32> to vector<16xf32>
      %20 = vector.shape_cast %19 : vector<16xf32> to vector<16x1xf32>
      %cst_17 = arith.constant 3.200000e+01 : f32
      %21 = vector.broadcast %cst_17 : f32 to vector<16x1xf32>
      %22 = arith.divf %20, %21 : vector<16x1xf32>
      %23 = vector.broadcast %22 : vector<16x1xf32> to vector<16x32xf32>
      %24 = arith.subf %18, %23 : vector<16x32xf32>
      %25 = arith.mulf %24, %24 : vector<16x32xf32>
      %cst_18 = arith.constant dense<0.000000e+00> : vector<16xf32>
      %26 = vector.multi_reduction <add>, %25, %cst_18 [1] : vector<16x32xf32> to vector<16xf32>
      %27 = vector.shape_cast %26 : vector<16xf32> to vector<16x1xf32>
      %cst_19 = arith.constant 3.200000e+01 : f32
      %28 = vector.broadcast %cst_19 : f32 to vector<16x1xf32>
      %29 = arith.divf %27, %28 : vector<16x1xf32>
      %c0_20 = arith.constant 0 : index
      %c0_21 = arith.constant 0 : index
      %30 = vector.load %arg6[%c0_20, %c0_21] : memref<1x32xf32, #tpu.memory_space<vmem>>, vector<1x32xf32>
      %cst_22 = arith.constant 9.99999996E-13 : f32
      %31 = vector.broadcast %cst_22 : f32 to vector<16x1xf32>
      %32 = arith.addf %29, %31 : vector<16x1xf32>
      %33 = math.rsqrt %32 : vector<16x1xf32>
      %34 = vector.broadcast %33 : vector<16x1xf32> to vector<16x32xf32>
      %35 = arith.mulf %24, %34 : vector<16x32xf32>
      %36 = vector.broadcast %30 : vector<1x32xf32> to vector<16x32xf32>
      %37 = arith.mulf %36, %35 : vector<16x32xf32>
      %c0_23 = arith.constant 0 : index
      %c0_24 = arith.constant 0 : index
      %38 = vector.load %arg7[%c0_23, %c0_24] : memref<1x32xf32, #tpu.memory_space<vmem>>, vector<1x32xf32>
      %39 = vector.broadcast %38 : vector<1x32xf32> to vector<16x32xf32>
      %40 = arith.addf %37, %39 : vector<16x32xf32>
      %41 = arith.truncf %40 : vector<16x32xf32> to vector<16x32xbf16>
      %c0_25 = arith.constant 0 : index
      %c0_26 = arith.constant 0 : index
      %42 = vector.load %arg8[%c0_25, %c0_26] : memref<16x32xbf16, #tpu.memory_space<vmem>>, vector<16x32xbf16>
      tpu.vector_store %arg8[%c0_25, %c0_26], %41 {strides = array<i32>} : memref<16x32xbf16, #tpu.memory_space<vmem>>, vector<16x32xbf16>,
    } else {
    }
    return
  }
  func.func @transform_0(%arg0: i32, %arg1: i32) -> (i32, i32) {
    %c0_i32 = arith.constant 0 : i32
    return %arg0, %arg1 : i32, i32
  }
  func.func @transform_1(%arg0: i32, %arg1: i32) -> (i32, i32) {
    %c0_i32 = arith.constant 0 : i32
    %c0_i32_0 = arith.constant 0 : i32
    return %arg1, %c0_i32 : i32, i32
  }
  func.func @transform_2(%arg0: i32, %arg1: i32) -> (i32, i32) {
    %c0_i32 = arith.constant 0 : i32
    %c0_i32_0 = arith.constant 0 : i32
    %c0_i32_1 = arith.constant 0 : i32
    return %c0_i32, %c0_i32_0 : i32, i32
  }
  func.func @transform_3(%arg0: i32, %arg1: i32) -> (i32, i32) {
    %c0_i32 = arith.constant 0 : i32
    %c0_i32_0 = arith.constant 0 : i32
    return %arg0, %c0_i32 : i32, i32
  }
  func.func @transform_4(%arg0: i32, %arg1: i32) -> (i32, i32) {
    %c0_i32 = arith.constant 0 : i32
    %c0_i32_0 = arith.constant 0 : i32
    %c0_i32_1 = arith.constant 0 : i32
    return %c0_i32, %c0_i32_0 : i32, i32
  }
  func.func @transform_5(%arg0: i32, %arg1: i32) -> (i32, i32) {
    %c0_i32 = arith.constant 0 : i32
    %c0_i32_0 = arith.constant 0 : i32
    %c0_i32_1 = arith.constant 0 : i32
    return %c0_i32, %c0_i32_0 : i32, i32
  }
  func.func @transform_6(%arg0: i32, %arg1: i32) -> (i32, i32) {
    %c0_i32 = arith.constant 0 : i32
    %c0_i32_0 = arith.constant 0 : i32
    return %arg0, %c0_i32 : i32, i32
  }
}

</mosaic_0001>

<llo_original>
// kernel: graph_encoder_forward.11
$region0: #{graph_encoder_forward.11}
  #allocation0 [shape = 'u32[]', space=smem, size = 0x4, offset = 0x4, fixed_abs, tag = 'smem constant byte address 0x4 - core index']
  #allocation1 [shape = 'u32[144,128]{1,0:T(1,128)}', space=vmem, size = 0x12000, scoped, tag = 'internal scratch']
  %s0 = inlined_call_operand.vmem [shape: bf16[2,8,32], index: 0, kind: input, shape index: {}]
  %s1 = inlined_call_operand.vmem [shape: bf16[8,32], index: 1, kind: input, shape index: {}]
  %s2 = inlined_call_operand.vmem [shape: f32[1,32], index: 2, kind: input, shape index: {}]
  %s3 = inlined_call_operand.vmem [shape: f32[1,32], index: 3, kind: input, shape index: {}]
  %s4 = inlined_call_operand.vmem [shape: bf16[2,8,32], index: 4, kind: output, shape index: {}]
  %s5 = sld [smem:[#allocation0]]
  $region49: #{graph_encoder_forward.11} parent=0
    _
  %s7 = ssub.s32 1, %s5
  %s8 = scalar_select 0, %s7, %s5
  loop: start=0, step=1, limit=4
  $region2: #{graph_encoder_forward.11} parent=0 // loop_pre_header
    _
  $region3: #{graph_encoder_forward.11} parent=0 // loop_header
    %s10 = sphi 0, %s14
    %p11 = scmp.ge.s32.totalorder %s10, 4
    %s17 = sphi 0, %s29
    %s18 = sphi 0, %s25
    %s19 = sphi 0, %s17
    %s20 = sphi 0, %s18
    %s21 = sphi 0, %s19
    %s22 = sphi 0, %s20
    %s34 = sphi 0, %s36
    %s37 = sphi 0, %s34
    %s38 = sphi 0, %s37
    %s54 = sphi 0, %s38
    %s60 = sphi 0, %s62
    %s63 = sphi 0, %s60
    %s64 = sphi 0, %s63
    %s80 = sphi 0, %s64
    %s84 = sphi 0, %s84
    %s86 = sphi 0, %s84
    %s87 = sphi 0, %s86
    %s101 = sphi 0, %s87
    %s105 = sphi 0, %s105
    %s107 = sphi 0, %s105
    %s108 = sphi 0, %s107
    %s122 = sphi 0, %s108
    %s130 = sphi 0, %s132
    %s133 = sphi 0, %s130
    %s134 = sphi 0, %s133
    %s150 = sphi 0, %s134
  $region4: #{graph_encoder_forward.11} parent=0 // loop_header_branch
    %13 = sbr.rel (%p11) target = $region8
  $region5: #{graph_encoder_forward.11} parent=0 // loop_body
    %s15 = ssub.s32 %s10, 1
    %s16 = ssub.s32 %s10, 2
    %s23 = sadd.s32 1, %s18
    %p24 = scmp.ge.s32.totalorder %s23, 1
    %s25 = scalar_select %p24, 0, %s23
    %s26 = sadd.s32 1, %s17
    %s27 = scalar_select %p24, %s26, %s17
    %p28 = scmp.ge.s32.totalorder %s27, 2
    %s29 = scalar_select %p28, 0, %s27
    %s30 = ssub.s32 %s17, %s29
    %s31 = ssub.s32 %s18, %s25
    %s32 = sor.u32 %s30, %s31
    %p33 = scmp.eq.s32.totalorder %s32, 0
    %s35 = sadd.s32 %s34, 1
    %s36 = scalar_select %p33, %s34, %s35
    %p39 = pneg %p33
    %p40 = scmp.eq.s32.totalorder %s10, 1
    %p41 = por %p39, %p40
    %p42 = scmp.ne.s32.totalorder %s34, %s37
    %p43 = scmp.eq.s32.totalorder %s10, 0
    %p44 = por %p42, %p43
    %p45 = scmp.ne.s32.totalorder %s34, %s37
    %p46 = scmp.eq.s32.totalorder %s15, 1
    %p47 = por %p45, %p46
    %p48 = scmp.ne.s32.totalorder %s37, %s38
    %p49 = scmp.eq.s32.totalorder %s15, 0
    %p50 = por %p48, %p49
    %p51 = scmp.ne.s32.totalorder %s37, %s38
    %p52 = scmp.eq.s32.totalorder %s16, 1
    %p53 = por %p51, %p52
    %p55 = scmp.ne.s32.totalorder %s38, %s54
    %p56 = scmp.eq.s32.totalorder %s16, 0
    %p57 = por %p55, %p56
    %s58 = ssub.s32 %s18, %s25
    %p59 = scmp.eq.s32.totalorder %s58, 0
    %s61 = sadd.s32 %s60, 1
    %s62 = scalar_select %p59, %s60, %s61
    %p65 = pneg %p59
    %p66 = scmp.eq.s32.totalorder %s10, 1
    %p67 = por %p65, %p66
    %p68 = scmp.ne.s32.totalorder %s60, %s63
    %p69 = scmp.eq.s32.totalorder %s10, 0
    %p70 = por %p68, %p69
    %p71 = scmp.ne.s32.totalorder %s60, %s63
    %p72 = scmp.eq.s32.totalorder %s15, 1
    %p73 = por %p71, %p72
    %p74 = scmp.ne.s32.totalorder %s63, %s64
    %p75 = scmp.eq.s32.totalorder %s15, 0
    %p76 = por %p74, %p75
    %p77 = scmp.ne.s32.totalorder %s63, %s64
    %p78 = scmp.eq.s32.totalorder %s16, 1
    %p79 = por %p77, %p78
    %p81 = scmp.ne.s32.totalorder %s64, %s80
    %p82 = scmp.eq.s32.totalorder %s16, 0
    %p83 = por %p81, %p82
    %s85 = sadd.s32 %s84, 1
    %p88 = scmp.eq.s32.totalorder %s10, 1
    %p89 = scmp.ne.s32.totalorder %s84, %s86
    %p90 = scmp.eq.s32.totalorder %s10, 0
    %p91 = por %p89, %p90
    %p92 = scmp.ne.s32.totalorder %s84, %s86
    %p93 = scmp.eq.s32.totalorder %s15, 1
    %p94 = por %p92, %p93
    %p95 = scmp.ne.s32.totalorder %s86, %s87
    %p96 = scmp.eq.s32.totalorder %s15, 0
    %p97 = por %p95, %p96
    %p98 = scmp.ne.s32.totalorder %s86, %s87
    %p99 = scmp.eq.s32.totalorder %s16, 1
    %p100 = por %p98, %p99
    %p102 = scmp.ne.s32.totalorder %s87, %s101
    %p103 = scmp.eq.s32.totalorder %s16, 0
    %p104 = por %p102, %p103
    %s106 = sadd.s32 %s105, 1
    %p109 = scmp.eq.s32.totalorder %s10, 1
    %p110 = scmp.ne.s32.totalorder %s105, %s107
    %p111 = scmp.eq.s32.totalorder %s10, 0
    %p112 = por %p110, %p111
    %p113 = scmp.ne.s32.totalorder %s105, %s107
    %p114 = scmp.eq.s32.totalorder %s15, 1
    %p115 = por %p113, %p114
    %p116 = scmp.ne.s32.totalorder %s107, %s108
    %p117 = scmp.eq.s32.totalorder %s15, 0
    %p118 = por %p116, %p117
    %p119 = scmp.ne.s32.totalorder %s107, %s108
    %p120 = scmp.eq.s32.totalorder %s16, 1
    %p121 = por %p119, %p120
    %p123 = scmp.ne.s32.totalorder %s108, %s122
    %p124 = scmp.eq.s32.totalorder %s16, 0
    %p125 = por %p123, %p124
    %s126 = ssub.s32 %s17, %s29
    %s127 = ssub.s32 %s18, %s25
    %s128 = sor.u32 %s126, %s127
    %p129 = scmp.eq.s32.totalorder %s128, 0
    %s131 = sadd.s32 %s130, 1
    %s132 = scalar_select %p129, %s130, %s131
    %p135 = pneg %p129
    %p136 = scmp.eq.s32.totalorder %s10, 1
    %p137 = por %p135, %p136
    %p138 = scmp.ne.s32.totalorder %s130, %s133
    %p139 = scmp.eq.s32.totalorder %s10, 0
    %p140 = por %p138, %p139
    %p141 = scmp.ne.s32.totalorder %s130, %s133
    %p142 = scmp.eq.s32.totalorder %s15, 1
    %p143 = por %p141, %p142
    %p144 = scmp.ne.s32.totalorder %s133, %s134
    %p145 = scmp.eq.s32.totalorder %s15, 0
    %p146 = por %p144, %p145
    %p147 = scmp.ne.s32.totalorder %s133, %s134
    %p148 = scmp.eq.s32.totalorder %s16, 1
    %p149 = por %p147, %p148
    %p151 = scmp.ne.s32.totalorder %s134, %s150
    %p152 = scmp.eq.s32.totalorder %s16, 0
    %p153 = por %p151, %p152
    %p154 = scmp.le.s32.totalorder 1, %s10
    %p155 = scmp.lt.s32.totalorder %s10, 3
    %p156 = pnand %p154, %p155
    %p157 = pneg %p156
    // Predicated region
    $region9: #{graph_encoder_forward.11} parent=5 // pred_check
      _
    $region10: #{graph_encoder_forward.11} parent=5 // pred_check_branch
      %159 = sbr.rel (%p156) target = $region12
    $region11: #{graph_encoder_forward.11} parent=5 // pred_region
      %s160 = ssub.s32 %s10, 1
      // Predicated region
      $region13: #{graph_encoder_forward.11} parent=11 // pred_check
        %p161 = pneg %p76
      $region14: #{graph_encoder_forward.11} parent=11 // pred_check_branch
        %163 = sbr.rel (%p161) target = $region16
      $region15: #{graph_encoder_forward.11} parent=11 // pred_region
        %p164 = scmp.lt.s32.totalorder %s20, 0
        %s165 = scalar_select %p164, %s20, 0
        %s166 = smul.addr %s165, 4
        %s167 = scalar_lea.vmem %s1, %s166
      $region16: #{graph_encoder_forward.11} parent=11 // pred_fallthru
        _
      // Predicated region
      $region17: #{graph_encoder_forward.11} parent=11 // pred_check
        %p168 = pneg %p97
      $region18: #{graph_encoder_forward.11} parent=11 // pred_check_branch
        %170 = sbr.rel (%p168) target = $region20
      $region19: #{graph_encoder_forward.11} parent=11 // pred_region
        _
      $region20: #{graph_encoder_forward.11} parent=11 // pred_fallthru
        _
      // Predicated region
      $region21: #{graph_encoder_forward.11} parent=11 // pred_check
        %p171 = pneg %p118
      $region22: #{graph_encoder_forward.11} parent=11 // pred_check_branch
        %173 = sbr.rel (%p171) target = $region24
      $region23: #{graph_encoder_forward.11} parent=11 // pred_region
        _
      $region24: #{graph_encoder_forward.11} parent=11 // pred_fallthru
        _
    $region12: #{graph_encoder_forward.11} parent=5 // pred_fallthru
      _
    %p174 = scmp.lt.s32.totalorder %s10, 2
    // Predicated region
    $region25: #{graph_encoder_forward.11} parent=5 // pred_check
      %p175 = pneg %p174
    $region26: #{graph_encoder_forward.11} parent=5 // pred_check_branch
      %177 = sbr.rel (%p175) target = $region28
    $region27: #{graph_encoder_forward.11} parent=5 // pred_region
      // Predicated region
      $region29: #{graph_encoder_forward.11} parent=27 // pred_check
        %p178 = pneg %p44
      $region30: #{graph_encoder_forward.11} parent=27 // pred_check_branch
        %180 = sbr.rel (%p178) target = $region32
      $region31: #{graph_encoder_forward.11} parent=27 // pred_region
        %p181 = scmp.lt.s32.totalorder %s17, 1
        %s182 = scalar_select %p181, %s17, 1
        %p183 = scmp.lt.s32.totalorder %s18, 0
        %s184 = scalar_select %p183, %s18, 0
        %s185 = sadd.s32 %s184, %s182
        %s186 = smul.addr %s185, 4
        %s187 = scalar_lea.vmem %s0, %s186
      $region32: #{graph_encoder_forward.11} parent=27 // pred_fallthru
        _
    $region28: #{graph_encoder_forward.11} parent=5 // pred_fallthru
      _
    %p188 = scmp.le.s32.totalorder 1, %s10
    %p189 = scmp.lt.s32.totalorder %s10, 3
    %p190 = pnand %p188, %p189
    %p191 = pneg %p190
    // Predicated region
    $region33: #{graph_encoder_forward.11} parent=5 // pred_check
      _
    $region34: #{graph_encoder_forward.11} parent=5 // pred_check_branch
      %193 = sbr.rel (%p190) target = $region36
    $region35: #{graph_encoder_forward.11} parent=5 // pred_region
      %s194 = ssub.s32 %s10, 1
      %p195 = scmp.lt.s32.totalorder %s19, 1
      %s196 = scalar_select %p195, %s19, 1
      %p197 = scmp.lt.s32.totalorder %s20, 0
      %s198 = scalar_select %p197, %s20, 0
      %s199 = sadd.s32 %s198, %s196
      %s200 = smul.addr %s199, 4
      %s201 = scalar_lea.vmem %s0, %s200
      %p202 = pneg %p50
      %p203 = pneg %p47
      %p204 = scmp.lt.s32.totalorder %s20, 0
      %s205 = scalar_select %p204, %s20, 0
      %s206 = smul.addr %s205, 4
      %s207 = scalar_lea.vmem %s1, %s206
      %p208 = pneg %p76
      %p209 = pneg %p73
      %p210 = pneg %p97
      %p211 = pneg %p94
      %p212 = pneg %p118
      %p213 = pneg %p115
      %p214 = pneg %p146
      %p215 = pneg %p143
      %p216 = scmp.lt.s32.totalorder %s19, 1
      %s217 = scalar_select %p216, %s19, 1
      %p218 = scmp.lt.s32.totalorder %s20, 0
      %s219 = scalar_select %p218, %s20, 0
      %s220 = sadd.s32 %s219, %s217
      %s221 = smul.addr %s220, 4
      %s222 = scalar_lea.vmem %s4, %s221
      %p223 = scmp.lt.s32.totalorder %s19, 1
      %s224 = scalar_select %p223, %s19, 1
      %p225 = scmp.lt.s32.totalorder %s20, 0
      %s226 = scalar_select %p225, %s20, 0
      %s227 = sadd.s32 %s226, %s224
      %s228 = smul.addr %s227, 4
      %s229 = scalar_lea.vmem %s0, %s228
      %p230 = scmp.lt.s32.totalorder %s20, 0
      %s231 = scalar_select %p230, %s20, 0
      %s232 = smul.addr %s231, 4
      %s233 = scalar_lea.vmem %s1, %s232
      %p234 = scmp.lt.s32.totalorder %s19, 1
      %s235 = scalar_select %p234, %s19, 1
      %p236 = scmp.lt.s32.totalorder %s20, 0
      %s237 = scalar_select %p236, %s20, 0
      %s238 = sadd.s32 %s237, %s235
      %s239 = smul.addr %s238, 4
      %s240 = scalar_lea.vmem %s4, %s239
      %v241 = vld [vmem:[%s229] sm:$0xf]
      %v242 = vunpack.c.l.bf16 %v241
      %v243 = vld [vmem:[%s233] sm:$0xf]
      %v244 = vunpack.c.l.bf16 %v243
      %v245 = vadd.f32 %v242, %v244
      %vm246 = vcmask 261120
      %v247 = vsel %vm246, %v245, 0.0
      %248 = vadd.xlane.f32.xlu0 %v247
      %v249 = vpop.xlane.xlu0 %248
      %v250 = vrcp.pop 32.0
      %v251 = vmul.f32 %v249, %v250
      %v252 = vsub.f32 %v245, %v251
      %v253 = vmul.f32 %v252, %v252
      %v254 = vsel %vm246, %v253, 0.0
      %255 = vadd.xlane.f32.xlu0 %v254
      %v256 = vpop.xlane.xlu0 %255
      %v257 = vmul.f32 %v256, %v250
      %v258 = vld [vmem:[%s2] sm:$0x1]
      %v259 = vadd.f32 %v257, 1e-12
      %v260 = vrsqrt.pop %v259
      %v261 = vmul.f32 %v252, %v260
      %v263 = vlaneseq
      %v264 = vshrl.u32 %v263, 7
      %v265 = vsub.s32 0, %v264
      %v266 = vrot.slane %v258, %v265
      %v268 = vmul.f32 %v266, %v261
      %v269 = vld [vmem:[%s3] sm:$0x1]
      %v271 = vlaneseq
      %v272 = vshrl.u32 %v271, 7
      %v273 = vsub.s32 0, %v272
      %v274 = vrot.slane %v269, %v273
      %v276 = vadd.f32 %v268, %v274
      %v277 = vpack.c.bf16 %v276, %v276
      %vm278 = vcmask 257024
      %279 = vst.msk [vmem:[%s240] sm:$0xf] %vm278, %v277
      %p280 = scmp.lt.s32.totalorder %s19, 1
      %s281 = scalar_select %p280, %s19, 1
      %p282 = scmp.lt.s32.totalorder %s20, 0
      %s283 = scalar_select %p282, %s20, 0
      %s284 = sadd.s32 %s283, %s281
      %s285 = smul.addr %s284, 4
      %s286 = scalar_lea.vmem %s4, %s285
      // Predicated region
      $region37: #{graph_encoder_forward.11} parent=35 // pred_check
        %p287 = pneg %p143
      $region38: #{graph_encoder_forward.11} parent=35 // pred_check_branch
        %289 = sbr.rel (%p287) target = $region40
      $region39: #{graph_encoder_forward.11} parent=35 // pred_region
        _
      $region40: #{graph_encoder_forward.11} parent=35 // pred_fallthru
        _
    $region36: #{graph_encoder_forward.11} parent=5 // pred_fallthru
      _
    %p290 = scmp.le.s32.totalorder 2, %s10
    // Predicated region
    $region41: #{graph_encoder_forward.11} parent=5 // pred_check
      %p291 = pneg %p290
    $region42: #{graph_encoder_forward.11} parent=5 // pred_check_branch
      %293 = sbr.rel (%p291) target = $region44
    $region43: #{graph_encoder_forward.11} parent=5 // pred_region
      %s294 = ssub.s32 %s10, 2
      // Predicated region
      $region45: #{graph_encoder_forward.11} parent=43 // pred_check
        %p295 = pneg %p149
      $region46: #{graph_encoder_forward.11} parent=43 // pred_check_branch
        %297 = sbr.rel (%p295) target = $region48
      $region47: #{graph_encoder_forward.11} parent=43 // pred_region
        %p298 = scmp.lt.s32.totalorder %s21, 1
        %s299 = scalar_select %p298, %s21, 1
        %p300 = scmp.lt.s32.totalorder %s22, 0
        %s301 = scalar_select %p300, %s22, 0
        %s302 = sadd.s32 %s301, %s299
        %s303 = smul.addr %s302, 4
        %s304 = scalar_lea.vmem %s4, %s303
      $region48: #{graph_encoder_forward.11} parent=43 // pred_fallthru
        _
    $region44: #{graph_encoder_forward.11} parent=5 // pred_fallthru
      _
  $region6: #{graph_encoder_forward.11} parent=0 // loop_footer
    %s14 = sadd.s32 1, %s10
  $region7: #{graph_encoder_forward.11} parent=0 // loop_footer_branch
    %9 = sbr.rel target = $region3
  $region8: #{graph_encoder_forward.11} parent=0 // loop_exit
    _

// kernel: graph_encoder_forward.12
$region0: #{graph_encoder_forward.12}
  #allocation0 [shape = 'u32[]', space=smem, size = 0x4, offset = 0x4, fixed_abs, tag = 'smem constant byte address 0x4 - core index']
  #allocation1 [shape = 'u32[144,128]{1,0:T(1,128)}', space=vmem, size = 0x12000, scoped, tag = 'internal scratch']
  #allocation2 [shape = 'f32[16,96]{1,0:T(8,128)}', space=vmem, size = 0x2000, scoped, tag = 'scratch operand']
  %s0 = inlined_call_operand.vmem [shape: bf16[16,32], index: 0, kind: input, shape index: {}]
  %s1 = inlined_call_operand.vmem [shape: bf16[32,96], index: 1, kind: input, shape index: {}]
  %s2 = inlined_call_operand.vmem [shape: f32[1,96], index: 2, kind: input, shape index: {}]
  %s3 = inlined_call_operand.vmem [shape: bf16[16,96], index: 3, kind: output, shape index: {}]
  %s4 = sld [smem:[#allocation0]]
  $region30: #{graph_encoder_forward.12} parent=0
    _
  %s6 = ssub.s32 1, %s4
  %s7 = scalar_select 0, %s6, %s4
  // Predicated region
  $region2: #{graph_encoder_forward.12} parent=0 // pred_check
    _
  $region3: #{graph_encoder_forward.12} parent=0 // pred_check_branch
    %9 = sbr.rel (0) target = $region5
  $region4: #{graph_encoder_forward.12} parent=0 // pred_region
    _
  $region5: #{graph_encoder_forward.12} parent=0 // pred_fallthru
    _
  // Predicated region
  $region6: #{graph_encoder_forward.12} parent=0 // pred_check
    _
  $region7: #{graph_encoder_forward.12} parent=0 // pred_check_branch
    %11 = sbr.rel (0) target = $region9
  $region8: #{graph_encoder_forward.12} parent=0 // pred_region
    _
  $region9: #{graph_encoder_forward.12} parent=0 // pred_fallthru
    _
  // Predicated region
  $region10: #{graph_encoder_forward.12} parent=0 // pred_check
    _
  $region11: #{graph_encoder_forward.12} parent=0 // pred_check_branch
    %13 = sbr.rel (0) target = $region13
  $region12: #{graph_encoder_forward.12} parent=0 // pred_region
    _
  $region13: #{graph_encoder_forward.12} parent=0 // pred_fallthru
    _
  %p15 = scmp.eq.s32.totalorder 0, 0
  // Predicated region
  $region14: #{graph_encoder_forward.12} parent=0 // pred_check
    %p16 = pneg %p15
  $region15: #{graph_encoder_forward.12} parent=0 // pred_check_branch
    %18 = sbr.rel (%p16) target = $region17
  $region16: #{graph_encoder_forward.12} parent=0 // pred_region
    %vm19 = vcmask 785408
    %20 = vst.msk [vmem:[#allocation2] sm:$0xff] %vm19, 0.0
    %21 = vst.msk [vmem:[#allocation2 + $0x8] sm:$0xff] %vm19, 0.0
  $region17: #{graph_encoder_forward.12} parent=0 // pred_fallthru
    _
  %v22 = vld [vmem:[#allocation2] sm:$0xff]
  %v23 = vld [vmem:[#allocation2 + $0x8] sm:$0xff]
  %v24 = vld [vmem:[%s0] sm:$0xf]
  %v25 = vld [vmem:[%s0 + $0x4] sm:$0xf]
  %v26 = vld [vmem:[%s1] sm:$0xf]
  %v27 = vld [vmem:[%s1 + $0x4] sm:$0xf]
  %v28 = vld [vmem:[%s1 + $0x8] sm:$0xf]
  %v29 = vld [vmem:[%s1 + $0xc] sm:$0xf]
  %v32 = vunpack.c.l.b16 %v24
  %v33 = vunpack.c.l.b16 %v25
  %v34 = vpack.c.b16 %v33, %v32
  %v39 = vunpack.c.l.b16 %v26
  %v40 = vunpack.c.l.b16 %v27
  %v41 = vunpack.c.l.b16 %v28
  %v42 = vunpack.c.l.b16 %v29
  %v43 = vpack.c.b16 %v40, %v39
  %v44 = vpack.c.b16 %v42, %v41
  %vm47 = vcmask 261120
  %v49 = vsel %vm47, %v34, 0
  %51 = vmatprep.subr.bf16.mxu0 0
  %52 = vmatpush1.bf16.msra.mxu0 0
  %53 = vmatprep.subr.bf16.mxu0 0
  %54 = vmatpush1.bf16.msra.mxu0 0
  %55 = vmatprep.subr.bf16.mxu0 0
  %56 = vmatpush1.bf16.msra.mxu0 0
  %57 = vmatprep.subr.bf16.mxu0 0
  %58 = vmatpush1.bf16.msra.mxu0 0
  %59 = vmatprep.subr.bf16.mxu0 0
  %60 = vmatpush1.bf16.msra.mxu0 0
  %61 = vmatprep.subr.bf16.mxu0 0
  %62 = vmatpush1.bf16.msra.mxu0 0
  %63 = vmatprep.subr.bf16.mxu0 0
  %64 = vmatpush1.bf16.msra.mxu0 %v44
  %65 = vmatprep.subr.bf16.mxu0 0
  %66 = vmatpush1.bf16.msra.mxu0 %v43
  %67 = vmatprep.subr.bf16.mxu0 0
  %68 = vmatpush2.bf16.msra.mxu0 0
  %69 = vmatprep.subr.bf16.mxu0 0
  %70 = vmatpush2.bf16.msra.mxu0 0
  %71 = vmatprep.subr.bf16.mxu0 0
  %72 = vmatpush2.bf16.msra.mxu0 0
  %73 = vmatprep.subr.bf16.mxu0 0
  %74 = vmatpush2.bf16.msra.mxu0 0
  %75 = vmatprep.subr.bf16.mxu0 0
  %76 = vmatpush2.bf16.msra.mxu0 0
  %77 = vmatprep.subr.bf16.mxu0 0
  %78 = vmatpush2.bf16.msra.mxu0 0
  %79 = vmatprep.subr.bf16.mxu0 0
  %80 = vmatpush2.bf16.msra.mxu0 0
  %81 = vmatprep.subr.bf16.mxu0 0
  %82 = vmatpush2.bf16.msra.mxu0 0
  %83 = vmatprep.mubr.bf16.mxu0 0
  %84 = vmatmul.mubr.bf16.gmra.mxu0 %v49
  %v85 = vpop.f32.mrf.mxu0
  %v86 = vadd.f32 0.0, %v85
  %v87 = vpop.f32.mrf.mxu0
  %v88 = vpop.f32.mrf.mxu0
  %v89 = vadd.f32 0.0, %v88
  %v90 = vpop.f32.mrf.mxu0
  %91 = vdwg.mxu0
  %v92 = vadd.f32 %v22, %v86
  %v93 = vadd.f32 %v23, %v89
  %vm94 = vcmask 785408
  %95 = vst.msk [vmem:[#allocation2] sm:$0xff] %vm94, %v92
  %96 = vst.msk [vmem:[#allocation2 + $0x8] sm:$0xff] %vm94, %v93
  // Predicated region
  $region18: #{graph_encoder_forward.12} parent=0 // pred_check
    %p97 = pneg %p15
  $region19: #{graph_encoder_forward.12} parent=0 // pred_check_branch
    %99 = sbr.rel (%p97) target = $region21
  $region20: #{graph_encoder_forward.12} parent=0 // pred_region
    %v100 = vld [vmem:[#allocation2] sm:$0xff]
    %v101 = vld [vmem:[#allocation2 + $0x8] sm:$0xff]
    %v102 = vld [vmem:[%s2] sm:$0x1]
    %v104 = vlaneseq
    %v105 = vshrl.u32 %v104, 7
    %v106 = vsub.s32 0, %v105
    %v107 = vrot.slane %v102, %v106
    %v109 = vadd.f32 %v100, %v107
    %v110 = vadd.f32 %v101, %v107
    %v111 = vpack.c.bf16 %v110, %v109
    %v113 = vunpack.c.l.b16 %v111
    %v114 = vunpack.c.h.b16 %v111
    %v115 = vpack.c.b16 %v113, %v113
    %v116 = vpack.c.b16 %v114, %v114
    %vm119 = vcmask 781312
    %120 = vst.msk [vmem:[%s3] sm:$0xf] %vm119, %v115
    %121 = vst.msk [vmem:[%s3 + $0x4] sm:$0xf] %vm119, %v116
  $region21: #{graph_encoder_forward.12} parent=0 // pred_fallthru
    _
  // Predicated region
  $region22: #{graph_encoder_forward.12} parent=0 // pred_check
    _
  $region23: #{graph_encoder_forward.12} parent=0 // pred_check_branch
    %123 = sbr.rel (0) target = $region25
  $region24: #{graph_encoder_forward.12} parent=0 // pred_region
    _
  $region25: #{graph_encoder_forward.12} parent=0 // pred_fallthru
    _
  // Predicated region
  $region26: #{graph_encoder_forward.12} parent=0 // pred_check
    _
  $region27: #{graph_encoder_forward.12} parent=0 // pred_check_branch
    %125 = sbr.rel (0) target = $region29
  $region28: #{graph_encoder_forward.12} parent=0 // pred_region
    _
  $region29: #{graph_encoder_forward.12} parent=0 // pred_fallthru
    _

// kernel: graph_encoder_forward.14
$region0: #{graph_encoder_forward.14}
  #allocation0 [shape = 'u32[]', space=smem, size = 0x4, offset = 0x4, fixed_abs, tag = 'smem constant byte address 0x4 - core index']
  #allocation1 [shape = 'u32[144,128]{1,0:T(1,128)}', space=vmem, size = 0x12000, scoped, tag = 'internal scratch']
  #allocation2 [shape = 'f32[16,32]{1,0:T(8,128)}', space=vmem, size = 0x2000, scoped, tag = 'scratch operand']
  %s0 = inlined_call_operand.vmem [shape: bf16[16,32], index: 0, kind: input, shape index: {}]
  %s1 = inlined_call_operand.vmem [shape: bf16[32,32], index: 1, kind: input, shape index: {}]
  %s2 = inlined_call_operand.vmem [shape: f32[1,32], index: 2, kind: input, shape index: {}]
  %s3 = inlined_call_operand.vmem [shape: bf16[16,32], index: 3, kind: input, shape index: {}]
  %s4 = inlined_call_operand.vmem [shape: f32[1,32], index: 4, kind: input, shape index: {}]
  %s5 = inlined_call_operand.vmem [shape: f32[1,32], index: 5, kind: input, shape index: {}]
  %s6 = inlined_call_operand.vmem [shape: bf16[16,32], index: 6, kind: output, shape index: {}]
  %s7 = sld [smem:[#allocation0]]
  $region42: #{graph_encoder_forward.14} parent=0
    _
  %s9 = ssub.s32 1, %s7
  %s10 = scalar_select 0, %s9, %s7
  // Predicated region
  $region2: #{graph_encoder_forward.14} parent=0 // pred_check
    _
  $region3: #{graph_encoder_forward.14} parent=0 // pred_check_branch
    %12 = sbr.rel (0) target = $region5
  $region4: #{graph_encoder_forward.14} parent=0 // pred_region
    _
  $region5: #{graph_encoder_forward.14} parent=0 // pred_fallthru
    _
  // Predicated region
  $region6: #{graph_encoder_forward.14} parent=0 // pred_check
    _
  $region7: #{graph_encoder_forward.14} parent=0 // pred_check_branch
    %14 = sbr.rel (0) target = $region9
  $region8: #{graph_encoder_forward.14} parent=0 // pred_region
    _
  $region9: #{graph_encoder_forward.14} parent=0 // pred_fallthru
    _
  // Predicated region
  $region10: #{graph_encoder_forward.14} parent=0 // pred_check
    _
  $region11: #{graph_encoder_forward.14} parent=0 // pred_check_branch
    %16 = sbr.rel (0) target = $region13
  $region12: #{graph_encoder_forward.14} parent=0 // pred_region
    _
  $region13: #{graph_encoder_forward.14} parent=0 // pred_fallthru
    _
  // Predicated region
  $region14: #{graph_encoder_forward.14} parent=0 // pred_check
    _
  $region15: #{graph_encoder_forward.14} parent=0 // pred_check_branch
    %18 = sbr.rel (0) target = $region17
  $region16: #{graph_encoder_forward.14} parent=0 // pred_region
    _
  $region17: #{graph_encoder_forward.14} parent=0 // pred_fallthru
    _
  // Predicated region
  $region18: #{graph_encoder_forward.14} parent=0 // pred_check
    _
  $region19: #{graph_encoder_forward.14} parent=0 // pred_check_branch
    %20 = sbr.rel (0) target = $region21
  $region20: #{graph_encoder_forward.14} parent=0 // pred_region
    _
  $region21: #{graph_encoder_forward.14} parent=0 // pred_fallthru
    _
  // Predicated region
  $region22: #{graph_encoder_forward.14} parent=0 // pred_check
    _
  $region23: #{graph_encoder_forward.14} parent=0 // pred_check_branch
    %22 = sbr.rel (0) target = $region25
  $region24: #{graph_encoder_forward.14} parent=0 // pred_region
    _
  $region25: #{graph_encoder_forward.14} parent=0 // pred_fallthru
    _
  %p24 = scmp.eq.s32.totalorder 0, 0
  // Predicated region
  $region26: #{graph_encoder_forward.14} parent=0 // pred_check
    %p25 = pneg %p24
  $region27: #{graph_encoder_forward.14} parent=0 // pred_check_branch
    %27 = sbr.rel (%p25) target = $region29
  $region28: #{graph_encoder_forward.14} parent=0 // pred_region
    %vm28 = vcmask 261120
    %29 = vst.msk [vmem:[#allocation2] sm:$0xff] %vm28, 0.0
    %30 = vst.msk [vmem:[#allocation2 + $0x8] sm:$0xff] %vm28, 0.0
  $region29: #{graph_encoder_forward.14} parent=0 // pred_fallthru
    _
  %v31 = vld [vmem:[#allocation2] sm:$0xff]
  %v32 = vld [vmem:[#allocation2 + $0x8] sm:$0xff]
  %v33 = vld [vmem:[%s0] sm:$0xf]
  %v34 = vld [vmem:[%s0 + $0x4] sm:$0xf]
  %v35 = vld [vmem:[%s1] sm:$0xf]
  %v36 = vld [vmem:[%s1 + $0x4] sm:$0xf]
  %v37 = vld [vmem:[%s1 + $0x8] sm:$0xf]
  %v38 = vld [vmem:[%s1 + $0xc] sm:$0xf]
  %v41 = vunpack.c.l.b16 %v33
  %v42 = vunpack.c.l.b16 %v34
  %v43 = vpack.c.b16 %v42, %v41
  %v48 = vunpack.c.l.b16 %v35
  %v49 = vunpack.c.l.b16 %v36
  %v50 = vunpack.c.l.b16 %v37
  %v51 = vunpack.c.l.b16 %v38
  %v52 = vpack.c.b16 %v49, %v48
  %v53 = vpack.c.b16 %v51, %v50
  %vm56 = vcmask 261120
  %v58 = vsel %vm56, %v43, 0
  %60 = vmatprep.subr.bf16.mxu0 0
  %61 = vmatpush1.bf16.msra.mxu0 0
  %62 = vmatprep.subr.bf16.mxu0 0
  %63 = vmatpush1.bf16.msra.mxu0 0
  %64 = vmatprep.subr.bf16.mxu0 0
  %65 = vmatpush1.bf16.msra.mxu0 0
  %66 = vmatprep.subr.bf16.mxu0 0
  %67 = vmatpush1.bf16.msra.mxu0 0
  %68 = vmatprep.subr.bf16.mxu0 0
  %69 = vmatpush1.bf16.msra.mxu0 0
  %70 = vmatprep.subr.bf16.mxu0 0
  %71 = vmatpush1.bf16.msra.mxu0 0
  %72 = vmatprep.subr.bf16.mxu0 0
  %73 = vmatpush1.bf16.msra.mxu0 %v53
  %74 = vmatprep.subr.bf16.mxu0 0
  %75 = vmatpush1.bf16.msra.mxu0 %v52
  %76 = vmatprep.subr.bf16.mxu0 0
  %77 = vmatpush2.bf16.msra.mxu0 0
  %78 = vmatprep.subr.bf16.mxu0 0
  %79 = vmatpush2.bf16.msra.mxu0 0
  %80 = vmatprep.subr.bf16.mxu0 0
  %81 = vmatpush2.bf16.msra.mxu0 0
  %82 = vmatprep.subr.bf16.mxu0 0
  %83 = vmatpush2.bf16.msra.mxu0 0
  %84 = vmatprep.subr.bf16.mxu0 0
  %85 = vmatpush2.bf16.msra.mxu0 0
  %86 = vmatprep.subr.bf16.mxu0 0
  %87 = vmatpush2.bf16.msra.mxu0 0
  %88 = vmatprep.subr.bf16.mxu0 0
  %89 = vmatpush2.bf16.msra.mxu0 0
  %90 = vmatprep.subr.bf16.mxu0 0
  %91 = vmatpush2.bf16.msra.mxu0 0
  %92 = vmatprep.mubr.bf16.mxu0 0
  %93 = vmatmul.mubr.bf16.gmra.mxu0 %v58
  %v94 = vpop.f32.mrf.mxu0
  %v95 = vadd.f32 0.0, %v94
  %v96 = vpop.f32.mrf.mxu0
  %v97 = vpop.f32.mrf.mxu0
  %v98 = vadd.f32 0.0, %v97
  %v99 = vpop.f32.mrf.mxu0
  %100 = vdwg.mxu0
  %v101 = vadd.f32 %v31, %v95
  %v102 = vadd.f32 %v32, %v98
  %103 = vst.msk [vmem:[#allocation2] sm:$0xff] %vm56, %v101
  %104 = vst.msk [vmem:[#allocation2 + $0x8] sm:$0xff] %vm56, %v102
  // Predicated region
  $region30: #{graph_encoder_forward.14} parent=0 // pred_check
    %p105 = pneg %p24
  $region31: #{graph_encoder_forward.14} parent=0 // pred_check_branch
    %107 = sbr.rel (%p105) target = $region33
  $region32: #{graph_encoder_forward.14} parent=0 // pred_region
    %v108 = vld [vmem:[#allocation2] sm:$0xff]
    %v109 = vld [vmem:[#allocation2 + $0x8] sm:$0xff]
    %v110 = vld [vmem:[%s2] sm:$0x1]
    %v112 = vlaneseq
    %v113 = vshrl.u32 %v112, 7
    %v114 = vsub.s32 0, %v113
    %v115 = vrot.slane %v110, %v114
    %v117 = vadd.f32 %v108, %v115
    %v118 = vadd.f32 %v109, %v115
    %v119 = vld [vmem:[%s3] sm:$0xf]
    %v120 = vld [vmem:[%s3 + $0x4] sm:$0xf]
    %v121 = vunpack.c.l.bf16 %v119
    %v122 = vunpack.c.l.bf16 %v120
    %v123 = vadd.f32 %v117, %v121
    %v124 = vadd.f32 %v118, %v122
    %v125 = vsel %vm56, %v123, 0.0
    %126 = vadd.xlane.f32.xlu0 %v125
    %v127 = vpop.xlane.xlu0 %126
    %v128 = vsel %vm56, %v124, 0.0
    %129 = vadd.xlane.f32.xlu0 %v128
    %v130 = vpop.xlane.xlu0 %129
    %v131 = vrcp.pop 32.0
    %v132 = vmul.f32 %v127, %v131
    %v133 = vmul.f32 %v130, %v131
    %v134 = vsub.f32 %v123, %v132
    %v135 = vsub.f32 %v124, %v133
    %v136 = vmul.f32 %v134, %v134
    %v137 = vmul.f32 %v135, %v135
    %v138 = vsel %vm56, %v136, 0.0
    %139 = vadd.xlane.f32.xlu0 %v138
    %v140 = vpop.xlane.xlu0 %139
    %v141 = vsel %vm56, %v137, 0.0
    %142 = vadd.xlane.f32.xlu0 %v141
    %v143 = vpop.xlane.xlu0 %142
    %v144 = vmul.f32 %v140, %v131
    %v145 = vmul.f32 %v143, %v131
    %v146 = vld [vmem:[%s4] sm:$0x1]
    %v147 = vadd.f32 %v144, 1e-12
    %v148 = vadd.f32 %v145, 1e-12
    %v149 = vrsqrt.pop %v147
    %v150 = vrsqrt.pop %v148
    %v151 = vmul.f32 %v134, %v149
    %v152 = vmul.f32 %v135, %v150
    %v154 = vlaneseq
    %v155 = vshrl.u32 %v154, 7
    %v156 = vsub.s32 0, %v155
    %v157 = vrot.slane %v146, %v156
    %v159 = vmul.f32 %v157, %v151
    %v160 = vmul.f32 %v157, %v152
    %v161 = vld [vmem:[%s5] sm:$0x1]
    %v163 = vlaneseq
    %v164 = vshrl.u32 %v163, 7
    %v165 = vsub.s32 0, %v164
    %v166 = vrot.slane %v161, %v165
    %v168 = vadd.f32 %v159, %v166
    %v169 = vadd.f32 %v160, %v166
    %v170 = vpack.c.bf16 %v169, %v168
    %v172 = vunpack.c.l.b16 %v170
    %v173 = vunpack.c.h.b16 %v170
    %v174 = vpack.c.b16 %v172, %v172
    %v175 = vpack.c.b16 %v173, %v173
    %vm178 = vcmask 257024
    %179 = vst.msk [vmem:[%s6] sm:$0xf] %vm178, %v174
    %180 = vst.msk [vmem:[%s6 + $0x4] sm:$0xf] %vm178, %v175
  $region33: #{graph_encoder_forward.14} parent=0 // pred_fallthru
    _
  // Predicated region
  $region34: #{graph_encoder_forward.14} parent=0 // pred_check
    _
  $region35: #{graph_encoder_forward.14} parent=0 // pred_check_branch
    %182 = sbr.rel (0) target = $region37
  $region36: #{graph_encoder_forward.14} parent=0 // pred_region
    _
  $region37: #{graph_encoder_forward.14} parent=0 // pred_fallthru
    _
  // Predicated region
  $region38: #{graph_encoder_forward.14} parent=0 // pred_check
    _
  $region39: #{graph_encoder_forward.14} parent=0 // pred_check_branch
    %184 = sbr.rel (0) target = $region41
  $region40: #{graph_encoder_forward.14} parent=0 // pred_region
    _
  $region41: #{graph_encoder_forward.14} parent=0 // pred_fallthru
    _

// kernel: graph_encoder_forward.13
$region0: #{graph_encoder_forward.13}
  #allocation0 [shape = 'u32[]', space=smem, size = 0x4, offset = 0x4, fixed_abs, tag = 'smem constant byte address 0x4 - core index']
  #allocation1 [shape = 'u32[144,128]{1,0:T(1,128)}', space=vmem, size = 0x12000, scoped, tag = 'internal scratch']
  #allocation2 [shape = 'f32[4,8,1]{2,1,0:T(8,128)}', space=vmem, size = 0x4000, scoped, tag = 'scratch operand']
  #allocation3 [shape = 'f32[4,8,1]{2,1,0:T(8,128)}', space=vmem, size = 0x4000, scoped, tag = 'scratch operand']
  #allocation4 [shape = 'f32[4,8,8]{2,1,0:T(8,128)}', space=vmem, size = 0x4000, scoped, tag = 'scratch operand']
  %s0 = inlined_call_operand.vmem [shape: bf16[2,4,8,8], index: 0, kind: input, shape index: {}]
  %s1 = inlined_call_operand.vmem [shape: bf16[2,4,8,8], index: 1, kind: input, shape index: {}]
  %s2 = inlined_call_operand.vmem [shape: bf16[2,4,8,8], index: 2, kind: input, shape index: {}]
  %s3 = inlined_call_operand.vmem [shape: f32[2,1,8], index: 3, kind: input, shape index: {}]
  %s4 = inlined_call_operand.vmem [shape: bf16[2,8,32], index: 4, kind: output, shape index: {}]
  %s5 = sld [smem:[#allocation0]]
  $region57: #{graph_encoder_forward.13} parent=0
    _
  %s7 = ssub.s32 1, %s5
  %s8 = scalar_select 0, %s7, %s5
  loop: start=0, step=1, limit=4
  $region2: #{graph_encoder_forward.13} parent=0 // loop_pre_header
    _
  $region3: #{graph_encoder_forward.13} parent=0 // loop_header
    %s10 = sphi 0, %s14
    %p11 = scmp.ge.s32.totalorder %s10, 4
    %s17 = sphi 0, %s36
    %s18 = sphi 0, %s32
    %s19 = sphi 0, %s28
    %s20 = sphi 0, %s17
    %s21 = sphi 0, %s18
    %s22 = sphi 0, %s19
    %s23 = sphi 0, %s20
    %s24 = sphi 0, %s21
    %s25 = sphi 0, %s22
    %s41 = sphi 0, %s43
    %s44 = sphi 0, %s41
    %s45 = sphi 0, %s44
    %s61 = sphi 0, %s45
    %s69 = sphi 0, %s71
    %s72 = sphi 0, %s69
    %s73 = sphi 0, %s72
    %s89 = sphi 0, %s73
    %s97 = sphi 0, %s99
    %s100 = sphi 0, %s97
    %s101 = sphi 0, %s100
    %s117 = sphi 0, %s101
    %s125 = sphi 0, %s127
    %s128 = sphi 0, %s125
    %s129 = sphi 0, %s128
    %s145 = sphi 0, %s129
    %s153 = sphi 0, %s155
    %s156 = sphi 0, %s153
    %s157 = sphi 0, %s156
    %s173 = sphi 0, %s157
  $region4: #{graph_encoder_forward.13} parent=0 // loop_header_branch
    %13 = sbr.rel (%p11) target = $region8
  $region5: #{graph_encoder_forward.13} parent=0 // loop_body
    %s15 = ssub.s32 %s10, 1
    %s16 = ssub.s32 %s10, 2
    %s26 = sadd.s32 1, %s19
    %p27 = scmp.ge.s32.totalorder %s26, 1
    %s28 = scalar_select %p27, 0, %s26
    %s29 = sadd.s32 1, %s18
    %s30 = scalar_select %p27, %s29, %s18
    %p31 = scmp.ge.s32.totalorder %s30, 1
    %s32 = scalar_select %p31, 0, %s30
    %s33 = sadd.s32 1, %s17
    %s34 = scalar_select %p31, %s33, %s17
    %p35 = scmp.ge.s32.totalorder %s34, 2
    %s36 = scalar_select %p35, 0, %s34
    %s37 = ssub.s32 %s17, %s36
    %s38 = ssub.s32 %s18, %s32
    %s39 = sor.u32 %s37, %s38
    %p40 = scmp.eq.s32.totalorder %s39, 0
    %s42 = sadd.s32 %s41, 1
    %s43 = scalar_select %p40, %s41, %s42
    %p46 = pneg %p40
    %p47 = scmp.eq.s32.totalorder %s10, 1
    %p48 = por %p46, %p47
    %p49 = scmp.ne.s32.totalorder %s41, %s44
    %p50 = scmp.eq.s32.totalorder %s10, 0
    %p51 = por %p49, %p50
    %p52 = scmp.ne.s32.totalorder %s41, %s44
    %p53 = scmp.eq.s32.totalorder %s15, 1
    %p54 = por %p52, %p53
    %p55 = scmp.ne.s32.totalorder %s44, %s45
    %p56 = scmp.eq.s32.totalorder %s15, 0
    %p57 = por %p55, %p56
    %p58 = scmp.ne.s32.totalorder %s44, %s45
    %p59 = scmp.eq.s32.totalorder %s16, 1
    %p60 = por %p58, %p59
    %p62 = scmp.ne.s32.totalorder %s45, %s61
    %p63 = scmp.eq.s32.totalorder %s16, 0
    %p64 = por %p62, %p63
    %s65 = ssub.s32 %s17, %s36
    %s66 = ssub.s32 %s19, %s28
    %s67 = sor.u32 %s65, %s66
    %p68 = scmp.eq.s32.totalorder %s67, 0
    %s70 = sadd.s32 %s69, 1
    %s71 = scalar_select %p68, %s69, %s70
    %p74 = pneg %p68
    %p75 = scmp.eq.s32.totalorder %s10, 1
    %p76 = por %p74, %p75
    %p77 = scmp.ne.s32.totalorder %s69, %s72
    %p78 = scmp.eq.s32.totalorder %s10, 0
    %p79 = por %p77, %p78
    %p80 = scmp.ne.s32.totalorder %s69, %s72
    %p81 = scmp.eq.s32.totalorder %s15, 1
    %p82 = por %p80, %p81
    %p83 = scmp.ne.s32.totalorder %s72, %s73
    %p84 = scmp.eq.s32.totalorder %s15, 0
    %p85 = por %p83, %p84
    %p86 = scmp.ne.s32.totalorder %s72, %s73
    %p87 = scmp.eq.s32.totalorder %s16, 1
    %p88 = por %p86, %p87
    %p90 = scmp.ne.s32.totalorder %s73, %s89
    %p91 = scmp.eq.s32.totalorder %s16, 0
    %p92 = por %p90, %p91
    %s93 = ssub.s32 %s17, %s36
    %s94 = ssub.s32 %s19, %s28
    %s95 = sor.u32 %s93, %s94
    %p96 = scmp.eq.s32.totalorder %s95, 0
    %s98 = sadd.s32 %s97, 1
    %s99 = scalar_select %p96, %s97, %s98
    %p102 = pneg %p96
    %p103 = scmp.eq.s32.totalorder %s10, 1
    %p104 = por %p102, %p103
    %p105 = scmp.ne.s32.totalorder %s97, %s100
    %p106 = scmp.eq.s32.totalorder %s10, 0
    %p107 = por %p105, %p106
    %p108 = scmp.ne.s32.totalorder %s97, %s100
    %p109 = scmp.eq.s32.totalorder %s15, 1
    %p110 = por %p108, %p109
    %p111 = scmp.ne.s32.totalorder %s100, %s101
    %p112 = scmp.eq.s32.totalorder %s15, 0
    %p113 = por %p111, %p112
    %p114 = scmp.ne.s32.totalorder %s100, %s101
    %p115 = scmp.eq.s32.totalorder %s16, 1
    %p116 = por %p114, %p115
    %p118 = scmp.ne.s32.totalorder %s101, %s117
    %p119 = scmp.eq.s32.totalorder %s16, 0
    %p120 = por %p118, %p119
    %s121 = ssub.s32 %s17, %s36
    %s122 = ssub.s32 %s19, %s28
    %s123 = sor.u32 %s121, %s122
    %p124 = scmp.eq.s32.totalorder %s123, 0
    %s126 = sadd.s32 %s125, 1
    %s127 = scalar_select %p124, %s125, %s126
    %p130 = pneg %p124
    %p131 = scmp.eq.s32.totalorder %s10, 1
    %p132 = por %p130, %p131
    %p133 = scmp.ne.s32.totalorder %s125, %s128
    %p134 = scmp.eq.s32.totalorder %s10, 0
    %p135 = por %p133, %p134
    %p136 = scmp.ne.s32.totalorder %s125, %s128
    %p137 = scmp.eq.s32.totalorder %s15, 1
    %p138 = por %p136, %p137
    %p139 = scmp.ne.s32.totalorder %s128, %s129
    %p140 = scmp.eq.s32.totalorder %s15, 0
    %p141 = por %p139, %p140
    %p142 = scmp.ne.s32.totalorder %s128, %s129
    %p143 = scmp.eq.s32.totalorder %s16, 1
    %p144 = por %p142, %p143
    %p146 = scmp.ne.s32.totalorder %s129, %s145
    %p147 = scmp.eq.s32.totalorder %s16, 0
    %p148 = por %p146, %p147
    %s149 = ssub.s32 %s17, %s36
    %s150 = ssub.s32 %s18, %s32
    %s151 = sor.u32 %s149, %s150
    %p152 = scmp.eq.s32.totalorder %s151, 0
    %s154 = sadd.s32 %s153, 1
    %s155 = scalar_select %p152, %s153, %s154
    %p158 = pneg %p152
    %p159 = scmp.eq.s32.totalorder %s10, 1
    %p160 = por %p158, %p159
    %p161 = scmp.ne.s32.totalorder %s153, %s156
    %p162 = scmp.eq.s32.totalorder %s10, 0
    %p163 = por %p161, %p162
    %p164 = scmp.ne.s32.totalorder %s153, %s156
    %p165 = scmp.eq.s32.totalorder %s15, 1
    %p166 = por %p164, %p165
    %p167 = scmp.ne.s32.totalorder %s156, %s157
    %p168 = scmp.eq.s32.totalorder %s15, 0
    %p169 = por %p167, %p168
    %p170 = scmp.ne.s32.totalorder %s156, %s157
    %p171 = scmp.eq.s32.totalorder %s16, 1
    %p172 = por %p170, %p171
    %p174 = scmp.ne.s32.totalorder %s157, %s173
    %p175 = scmp.eq.s32.totalorder %s16, 0
    %p176 = por %p174, %p175
    %p177 = scmp.le.s32.totalorder 1, %s10
    %p178 = scmp.lt.s32.totalorder %s10, 3
    %p179 = pnand %p177, %p178
    %p180 = pneg %p179
    // Predicated region
    $region9: #{graph_encoder_forward.13} parent=5 // pred_check
      _
    $region10: #{graph_encoder_forward.13} parent=5 // pred_check_branch
      %182 = sbr.rel (%p179) target = $region12
    $region11: #{graph_encoder_forward.13} parent=5 // pred_region
      %s183 = ssub.s32 %s10, 1
    $region12: #{graph_encoder_forward.13} parent=5 // pred_fallthru
      _
    %p184 = scmp.lt.s32.totalorder %s10, 2
    // Predicated region
    $region13: #{graph_encoder_forward.13} parent=5 // pred_check
      %p185 = pneg %p184
    $region14: #{graph_encoder_forward.13} parent=5 // pred_check_branch
      %187 = sbr.rel (%p185) target = $region16
    $region15: #{graph_encoder_forward.13} parent=5 // pred_region
      // Predicated region
      $region17: #{graph_encoder_forward.13} parent=15 // pred_check
        %p188 = pneg %p51
      $region18: #{graph_encoder_forward.13} parent=15 // pred_check_branch
        %190 = sbr.rel (%p188) target = $region20
      $region19: #{graph_encoder_forward.13} parent=15 // pred_region
        %p191 = scmp.lt.s32.totalorder %s17, 1
        %s192 = scalar_select %p191, %s17, 1
        %p193 = scmp.lt.s32.totalorder %s18, 0
        %s194 = scalar_select %p193, %s18, 0
        %s195 = smul.addr %s192, 4
        %s196 = sadd.s32 %s194, %s195
        %s197 = smul.addr %s196, 4
        %s198 = scalar_lea.vmem %s0, %s197
      $region20: #{graph_encoder_forward.13} parent=15 // pred_fallthru
        _
      // Predicated region
      $region21: #{graph_encoder_forward.13} parent=15 // pred_check
        %p199 = pneg %p79
      $region22: #{graph_encoder_forward.13} parent=15 // pred_check_branch
        %201 = sbr.rel (%p199) target = $region24
      $region23: #{graph_encoder_forward.13} parent=15 // pred_region
        %p202 = scmp.lt.s32.totalorder %s17, 1
        %s203 = scalar_select %p202, %s17, 1
        %p204 = scmp.lt.s32.totalorder %s19, 0
        %s205 = scalar_select %p204, %s19, 0
        %s206 = smul.addr %s203, 4
        %s207 = sadd.s32 %s205, %s206
        %s208 = smul.addr %s207, 4
        %s209 = scalar_lea.vmem %s1, %s208
      $region24: #{graph_encoder_forward.13} parent=15 // pred_fallthru
        _
      // Predicated region
      $region25: #{graph_encoder_forward.13} parent=15 // pred_check
        %p210 = pneg %p107
      $region26: #{graph_encoder_forward.13} parent=15 // pred_check_branch
        %212 = sbr.rel (%p210) target = $region28
      $region27: #{graph_encoder_forward.13} parent=15 // pred_region
        %p213 = scmp.lt.s32.totalorder %s17, 1
        %s214 = scalar_select %p213, %s17, 1
        %p215 = scmp.lt.s32.totalorder %s19, 0
        %s216 = scalar_select %p215, %s19, 0
        %s217 = smul.addr %s214, 4
        %s218 = sadd.s32 %s216, %s217
        %s219 = smul.addr %s218, 4
        %s220 = scalar_lea.vmem %s2, %s219
      $region28: #{graph_encoder_forward.13} parent=15 // pred_fallthru
        _
      // Predicated region
      $region29: #{graph_encoder_forward.13} parent=15 // pred_check
        %p221 = pneg %p135
      $region30: #{graph_encoder_forward.13} parent=15 // pred_check_branch
        %223 = sbr.rel (%p221) target = $region32
      $region31: #{graph_encoder_forward.13} parent=15 // pred_region
        %p224 = scmp.lt.s32.totalorder %s17, 1
        %s225 = scalar_select %p224, %s17, 1
        %p226 = scmp.lt.s32.totalorder %s19, 0
        %s227 = scalar_select %p226, %s19, 0
        %s228 = sadd.s32 %s227, %s225
        %s229 = scalar_lea.vmem %s3, %s228
      $region32: #{graph_encoder_forward.13} parent=15 // pred_fallthru
        _
    $region16: #{graph_encoder_forward.13} parent=5 // pred_fallthru
      _
    %p230 = scmp.le.s32.totalorder 1, %s10
    %p231 = scmp.lt.s32.totalorder %s10, 3
    %p232 = pnand %p230, %p231
    %p233 = pneg %p232
    // Predicated region
    $region33: #{graph_encoder_forward.13} parent=5 // pred_check
      _
    $region34: #{graph_encoder_forward.13} parent=5 // pred_check_branch
      %235 = sbr.rel (%p232) target = $region36
    $region35: #{graph_encoder_forward.13} parent=5 // pred_region
      %s236 = ssub.s32 %s10, 1
      %p237 = scmp.lt.s32.totalorder %s20, 1
      %s238 = scalar_select %p237, %s20, 1
      %p239 = scmp.lt.s32.totalorder %s21, 0
      %s240 = scalar_select %p239, %s21, 0
      %s241 = smul.addr %s238, 4
      %s242 = sadd.s32 %s240, %s241
      %s243 = smul.addr %s242, 4
      %s244 = scalar_lea.vmem %s0, %s243
      %p245 = pneg %p57
      %p246 = pneg %p54
      %p247 = scmp.lt.s32.totalorder %s20, 1
      %s248 = scalar_select %p247, %s20, 1
      %p249 = scmp.lt.s32.totalorder %s22, 0
      %s250 = scalar_select %p249, %s22, 0
      %s251 = smul.addr %s248, 4
      %s252 = sadd.s32 %s250, %s251
      %s253 = smul.addr %s252, 4
      %s254 = scalar_lea.vmem %s1, %s253
      %p255 = pneg %p85
      %p256 = pneg %p82
      %p257 = scmp.lt.s32.totalorder %s20, 1
      %s258 = scalar_select %p257, %s20, 1
      %p259 = scmp.lt.s32.totalorder %s22, 0
      %s260 = scalar_select %p259, %s22, 0
      %s261 = smul.addr %s258, 4
      %s262 = sadd.s32 %s260, %s261
      %s263 = smul.addr %s262, 4
      %s264 = scalar_lea.vmem %s2, %s263
      %p265 = pneg %p113
      %p266 = pneg %p110
      %p267 = scmp.lt.s32.totalorder %s20, 1
      %s268 = scalar_select %p267, %s20, 1
      %p269 = scmp.lt.s32.totalorder %s22, 0
      %s270 = scalar_select %p269, %s22, 0
      %s271 = sadd.s32 %s270, %s268
      %s272 = scalar_lea.vmem %s3, %s271
      %p273 = pneg %p141
      %p274 = pneg %p138
      %p275 = pneg %p169
      %p276 = pneg %p166
      %p277 = scmp.lt.s32.totalorder %s20, 1
      %s278 = scalar_select %p277, %s20, 1
      %p279 = scmp.lt.s32.totalorder %s21, 0
      %s280 = scalar_select %p279, %s21, 0
      %s281 = sadd.s32 %s280, %s278
      %s282 = smul.addr %s281, 4
      %s283 = scalar_lea.vmem %s4, %s282
      %p284 = scmp.lt.s32.totalorder %s20, 1
      %s285 = scalar_select %p284, %s20, 1
      %p286 = scmp.lt.s32.totalorder %s21, 0
      %s287 = scalar_select %p286, %s21, 0
      %s288 = smul.addr %s285, 4
      %s289 = sadd.s32 %s287, %s288
      %s290 = smul.addr %s289, 4
      %s291 = scalar_lea.vmem %s0, %s290
      %p292 = scmp.lt.s32.totalorder %s20, 1
      %s293 = scalar_select %p292, %s20, 1
      %p294 = scmp.lt.s32.totalorder %s22, 0
      %s295 = scalar_select %p294, %s22, 0
      %s296 = smul.addr %s293, 4
      %s297 = sadd.s32 %s295, %s296
      %s298 = smul.addr %s297, 4
      %s299 = scalar_lea.vmem %s1, %s298
      %p300 = scmp.lt.s32.totalorder %s20, 1
      %s301 = scalar_select %p300, %s20, 1
      %p302 = scmp.lt.s32.totalorder %s22, 0
      %s303 = scalar_select %p302, %s22, 0
      %s304 = smul.addr %s301, 4
      %s305 = sadd.s32 %s303, %s304
      %s306 = smul.addr %s305, 4
      %s307 = scalar_lea.vmem %s2, %s306
      %p308 = scmp.lt.s32.totalorder %s20, 1
      %s309 = scalar_select %p308, %s20, 1
      %p310 = scmp.lt.s32.totalorder %s22, 0
      %s311 = scalar_select %p310, %s22, 0
      %s312 = sadd.s32 %s311, %s309
      %s313 = scalar_lea.vmem %s3, %s312
      %p314 = scmp.lt.s32.totalorder %s20, 1
      %s315 = scalar_select %p314, %s20, 1
      %p316 = scmp.lt.s32.totalorder %s21, 0
      %s317 = scalar_select %p316, %s21, 0
      %s318 = sadd.s32 %s317, %s315
      %s319 = smul.addr %s318, 4
      %s320 = scalar_lea.vmem %s4, %s319
      %p322 = scmp.eq.s32.totalorder %s22, 0
      // Predicated region
      $region37: #{graph_encoder_forward.13} parent=35 // pred_check
        %p323 = pneg %p322
      $region38: #{graph_encoder_forward.13} parent=35 // pred_check_branch
        %325 = sbr.rel (%p323) target = $region40
      $region39: #{graph_encoder_forward.13} parent=35 // pred_region
        %vm326 = vcmask 7168
        %327 = vst.msk [vmem:[#allocation2] sm:$0xff] %vm326, -inf
        %328 = vst.msk [vmem:[#allocation2 + $0x8] sm:$0xff] %vm326, -inf
        %329 = vst.msk [vmem:[#allocation2 + $0x10] sm:$0xff] %vm326, -inf
        %330 = vst.msk [vmem:[#allocation2 + $0x18] sm:$0xff] %vm326, -inf
        %331 = vst.msk [vmem:[#allocation3] sm:$0xff] %vm326, 0.0
        %332 = vst.msk [vmem:[#allocation3 + $0x8] sm:$0xff] %vm326, 0.0
        %333 = vst.msk [vmem:[#allocation3 + $0x10] sm:$0xff] %vm326, 0.0
        %334 = vst.msk [vmem:[#allocation3 + $0x18] sm:$0xff] %vm326, 0.0
        %vm335 = vcmask 64512
        %336 = vst.msk [vmem:[#allocation4] sm:$0xff] %vm335, 0.0
        %337 = vst.msk [vmem:[#allocation4 + $0x8] sm:$0xff] %vm335, 0.0
        %338 = vst.msk [vmem:[#allocation4 + $0x10] sm:$0xff] %vm335, 0.0
        %339 = vst.msk [vmem:[#allocation4 + $0x18] sm:$0xff] %vm335, 0.0
      $region40: #{graph_encoder_forward.13} parent=35 // pred_fallthru
        _
      %v340 = vld [vmem:[%s291] sm:$0xf]
      %v341 = vld [vmem:[%s291 + $0x4] sm:$0xf]
      %v342 = vld [vmem:[%s291 + $0x8] sm:$0xf]
      %v343 = vld [vmem:[%s291 + $0xc] sm:$0xf]
      %v344 = vld [vmem:[%s299] sm:$0xf]
      %v345 = vld [vmem:[%s299 + $0x4] sm:$0xf]
      %v346 = vld [vmem:[%s299 + $0x8] sm:$0xf]
      %v347 = vld [vmem:[%s299 + $0xc] sm:$0xf]
      %vm348 = vcmask 64512
      %v350 = vsel %vm348, %v340, 0
      %v353 = vsel %vm348, %v344, 0
      %355 = vmatprep.subr.bf16.mxu0 0
      %356 = vmatpush1.bf16.xpose.msra.mxu0 0
      %357 = vmatprep.subr.bf16.mxu0 0
      %358 = vmatpush1.bf16.xpose.msra.mxu0 0
      %359 = vmatprep.subr.bf16.mxu0 0
      %360 = vmatpush1.bf16.xpose.msra.mxu0 0
      %361 = vmatprep.subr.bf16.mxu0 0
      %362 = vmatpush1.bf16.xpose.msra.mxu0 0
      %363 = vmatprep.subr.bf16.mxu0 0
      %364 = vmatpush1.bf16.xpose.msra.mxu0 0
      %365 = vmatprep.subr.bf16.mxu0 0
      %366 = vmatpush1.bf16.xpose.msra.mxu0 0
      %367 = vmatprep.subr.bf16.mxu0 0
      %368 = vmatpush1.bf16.xpose.msra.mxu0 0
      %369 = vmatprep.subr.bf16.mxu0 0
      %370 = vmatpush1.bf16.xpose.msra.mxu0 %v353
      %371 = vmatprep.subr.bf16.mxu0 0
      %372 = vmatpush2.bf16.xpose.msra.mxu0 0
      %373 = vmatprep.subr.bf16.mxu0 0
      %374 = vmatpush2.bf16.xpose.msra.mxu0 0
      %375 = vmatprep.subr.bf16.mxu0 0
      %376 = vmatpush2.bf16.xpose.msra.mxu0 0
      %377 = vmatprep.subr.bf16.mxu0 0
      %378 = vmatpush2.bf16.xpose.msra.mxu0 0
      %379 = vmatprep.subr.bf16.mxu0 0
      %380 = vmatpush2.bf16.xpose.msra.mxu0 0
      %381 = vmatprep.subr.bf16.mxu0 0
      %382 = vmatpush2.bf16.xpose.msra.mxu0 0
      %383 = vmatprep.subr.bf16.mxu0 0
      %384 = vmatpush2.bf16.xpose.msra.mxu0 0
      %385 = vmatprep.subr.bf16.mxu0 0
      %386 = vmatpush2.bf16.xpose.msra.mxu0 0
      %387 = vmatprep.mubr.bf16.mxu0 0
      %388 = vmatmul.mubr.bf16.gmra.mxu0 %v350
      %v389 = vpop.f32.mrf.mxu0
      %v390 = vadd.f32 0.0, %v389
      %v391 = vpop.f32.mrf.mxu0
      %v392 = vpop.f32.mrf.mxu0
      %v393 = vpop.f32.mrf.mxu0
      %394 = vdwg.mxu0
      %v396 = vsel %vm348, %v341, 0
      %v399 = vsel %vm348, %v345, 0
      %401 = vmatprep.subr.bf16.mxu0 0
      %402 = vmatpush1.bf16.xpose.msra.mxu0 0
      %403 = vmatprep.subr.bf16.mxu0 0
      %404 = vmatpush1.bf16.xpose.msra.mxu0 0
      %405 = vmatprep.subr.bf16.mxu0 0
      %406 = vmatpush1.bf16.xpose.msra.mxu0 0
      %407 = vmatprep.subr.bf16.mxu0 0
      %408 = vmatpush1.bf16.xpose.msra.mxu0 0
      %409 = vmatprep.subr.bf16.mxu0 0
      %410 = vmatpush1.bf16.xpose.msra.mxu0 0
      %411 = vmatprep.subr.bf16.mxu0 0
      %412 = vmatpush1.bf16.xpose.msra.mxu0 0
      %413 = vmatprep.subr.bf16.mxu0 0
      %414 = vmatpush1.bf16.xpose.msra.mxu0 0
      %415 = vmatprep.subr.bf16.mxu0 0
      %416 = vmatpush1.bf16.xpose.msra.mxu0 %v399
      %417 = vmatprep.subr.bf16.mxu0 0
      %418 = vmatpush2.bf16.xpose.msra.mxu0 0
      %419 = vmatprep.subr.bf16.mxu0 0
      %420 = vmatpush2.bf16.xpose.msra.mxu0 0
      %421 = vmatprep.subr.bf16.mxu0 0
      %422 = vmatpush2.bf16.xpose.msra.mxu0 0
      %423 = vmatprep.subr.bf16.mxu0 0
      %424 = vmatpush2.bf16.xpose.msra.mxu0 0
      %425 = vmatprep.subr.bf16.mxu0 0
      %426 = vmatpush2.bf16.xpose.msra.mxu0 0
      %427 = vmatprep.subr.bf16.mxu0 0
      %428 = vmatpush2.bf16.xpose.msra.mxu0 0
      %429 = vmatprep.subr.bf16.mxu0 0
      %430 = vmatpush2.bf16.xpose.msra.mxu0 0
      %431 = vmatprep.subr.bf16.mxu0 0
      %432 = vmatpush2.bf16.xpose.msra.mxu0 0
      %433 = vmatprep.mubr.bf16.mxu0 0
      %434 = vmatmul.mubr.bf16.gmra.mxu0 %v396
      %v435 = vpop.f32.mrf.mxu0
      %v436 = vadd.f32 0.0, %v435
      %v437 = vpop.f32.mrf.mxu0
      %v438 = vpop.f32.mrf.mxu0
      %v439 = vpop.f32.mrf.mxu0
      %440 = vdwg.mxu0
      %v442 = vsel %vm348, %v342, 0
      %v445 = vsel %vm348, %v346, 0
      %447 = vmatprep.subr.bf16.mxu0 0
      %448 = vmatpush1.bf16.xpose.msra.mxu0 0
      %449 = vmatprep.subr.bf16.mxu0 0
      %450 = vmatpush1.bf16.xpose.msra.mxu0 0
      %451 = vmatprep.subr.bf16.mxu0 0
      %452 = vmatpush1.bf16.xpose.msra.mxu0 0
      %453 = vmatprep.subr.bf16.mxu0 0
      %454 = vmatpush1.bf16.xpose.msra.mxu0 0
      %455 = vmatprep.subr.bf16.mxu0 0
      %456 = vmatpush1.bf16.xpose.msra.mxu0 0
      %457 = vmatprep.subr.bf16.mxu0 0
      %458 = vmatpush1.bf16.xpose.msra.mxu0 0
      %459 = vmatprep.subr.bf16.mxu0 0
      %460 = vmatpush1.bf16.xpose.msra.mxu0 0
      %461 = vmatprep.subr.bf16.mxu0 0
      %462 = vmatpush1.bf16.xpose.msra.mxu0 %v445
      %463 = vmatprep.subr.bf16.mxu0 0
      %464 = vmatpush2.bf16.xpose.msra.mxu0 0
      %465 = vmatprep.subr.bf16.mxu0 0
      %466 = vmatpush2.bf16.xpose.msra.mxu0 0
      %467 = vmatprep.subr.bf16.mxu0 0
      %468 = vmatpush2.bf16.xpose.msra.mxu0 0
      %469 = vmatprep.subr.bf16.mxu0 0
      %470 = vmatpush2.bf16.xpose.msra.mxu0 0
      %471 = vmatprep.subr.bf16.mxu0 0
      %472 = vmatpush2.bf16.xpose.msra.mxu0 0
      %473 = vmatprep.subr.bf16.mxu0 0
      %474 = vmatpush2.bf16.xpose.msra.mxu0 0
      %475 = vmatprep.subr.bf16.mxu0 0
      %476 = vmatpush2.bf16.xpose.msra.mxu0 0
      %477 = vmatprep.subr.bf16.mxu0 0
      %478 = vmatpush2.bf16.xpose.msra.mxu0 0
      %479 = vmatprep.mubr.bf16.mxu0 0
      %480 = vmatmul.mubr.bf16.gmra.mxu0 %v442
      %v481 = vpop.f32.mrf.mxu0
      %v482 = vadd.f32 0.0, %v481
      %v483 = vpop.f32.mrf.mxu0
      %v484 = vpop.f32.mrf.mxu0
      %v485 = vpop.f32.mrf.mxu0
      %486 = vdwg.mxu0
      %v488 = vsel %vm348, %v343, 0
      %v491 = vsel %vm348, %v347, 0
      %493 = vmatprep.subr.bf16.mxu0 0
      %494 = vmatpush1.bf16.xpose.msra.mxu0 0
      %495 = vmatprep.subr.bf16.mxu0 0
      %496 = vmatpush1.bf16.xpose.msra.mxu0 0
      %497 = vmatprep.subr.bf16.mxu0 0
      %498 = vmatpush1.bf16.xpose.msra.mxu0 0
      %499 = vmatprep.subr.bf16.mxu0 0
      %500 = vmatpush1.bf16.xpose.msra.mxu0 0
      %501 = vmatprep.subr.bf16.mxu0 0
      %502 = vmatpush1.bf16.xpose.msra.mxu0 0
      %503 = vmatprep.subr.bf16.mxu0 0
      %504 = vmatpush1.bf16.xpose.msra.mxu0 0
      %505 = vmatprep.subr.bf16.mxu0 0
      %506 = vmatpush1.bf16.xpose.msra.mxu0 0
      %507 = vmatprep.subr.bf16.mxu0 0
      %508 = vmatpush1.bf16.xpose.msra.mxu0 %v491
      %509 = vmatprep.subr.bf16.mxu0 0
      %510 = vmatpush2.bf16.xpose.msra.mxu0 0
      %511 = vmatprep.subr.bf16.mxu0 0
      %512 = vmatpush2.bf16.xpose.msra.mxu0 0
      %513 = vmatprep.subr.bf16.mxu0 0
      %514 = vmatpush2.bf16.xpose.msra.mxu0 0
      %515 = vmatprep.subr.bf16.mxu0 0
      %516 = vmatpush2.bf16.xpose.msra.mxu0 0
      %517 = vmatprep.subr.bf16.mxu0 0
      %518 = vmatpush2.bf16.xpose.msra.mxu0 0
      %519 = vmatprep.subr.bf16.mxu0 0
      %520 = vmatpush2.bf16.xpose.msra.mxu0 0
      %521 = vmatprep.subr.bf16.mxu0 0
      %522 = vmatpush2.bf16.xpose.msra.mxu0 0
      %523 = vmatprep.subr.bf16.mxu0 0
      %524 = vmatpush2.bf16.xpose.msra.mxu0 0
      %525 = vmatprep.mubr.bf16.mxu0 0
      %526 = vmatmul.mubr.bf16.gmra.mxu0 %v488
      %v527 = vpop.f32.mrf.mxu0
      %v528 = vadd.f32 0.0, %v527
      %v529 = vpop.f32.mrf.mxu0
      %v530 = vpop.f32.mrf.mxu0
      %v531 = vpop.f32.mrf.mxu0
      %532 = vdwg.mxu0
      %v533 = vmul.f32 %v390, 0.35355338
      %v534 = vmul.f32 %v436, 0.35355338
      %v535 = vmul.f32 %v482, 0.35355338
      %v536 = vmul.f32 %v528, 0.35355338
      %v537 = vld [vmem:[%s313] sm:$0x1]
      %v539 = vlaneseq
      %v540 = vshrl.u32 %v539, 7
      %v541 = vsub.s32 0, %v540
      %v542 = vrot.slane %v537, %v541
      %v544 = vadd.f32 %v533, %v542
      %v545 = vadd.f32 %v534, %v542
      %v546 = vadd.f32 %v535, %v542
      %v547 = vadd.f32 %v536, %v542
      %v548 = vld [vmem:[#allocation2] sm:$0xff]
      %v549 = vld [vmem:[#allocation2 + $0x8] sm:$0xff]
      %v550 = vld [vmem:[#allocation2 + $0x10] sm:$0xff]
      %v551 = vld [vmem:[#allocation2 + $0x18] sm:$0xff]
      %v552 = vsel %vm348, %v544, -inf
      %553 = vmax.xlane.f32.xlu0 %v552
      %v554 = vpop.xlane.xlu0 %553
      %v555 = vsel %vm348, %v545, -inf
      %556 = vmax.xlane.f32.xlu0 %v555
      %v557 = vpop.xlane.xlu0 %556
      %v558 = vsel %vm348, %v546, -inf
      %559 = vmax.xlane.f32.xlu0 %v558
      %v560 = vpop.xlane.xlu0 %559
      %v561 = vsel %vm348, %v547, -inf
      %562 = vmax.xlane.f32.xlu0 %v561
      %v563 = vpop.xlane.xlu0 %562
      %v564 = vmax.f32 %v548, %v554
      %v565 = vmax.f32 %v549, %v557
      %v566 = vmax.f32 %v550, %v560
      %v567 = vmax.f32 %v551, %v563
      %v568 = vsub.f32 %v548, %v564
      %v569 = vsub.f32 %v549, %v565
      %v570 = vsub.f32 %v550, %v566
      %v571 = vsub.f32 %v551, %v567
      %v572 = vmul.f32 %v568, 1.442695
      %v573 = vpow.pop %v572
      %v574 = vmul.f32 %v569, 1.442695
      %v575 = vpow.pop %v574
      %v576 = vmul.f32 %v570, 1.442695
      %v577 = vpow.pop %v576
      %v578 = vmul.f32 %v571, 1.442695
      %v579 = vpow.pop %v578
      %581 = vset.pattern.permute.xlu0 0
      %582 = vperm.xlu0 %581, %v564
      %v583 = vpop.permute.xlu0 %582
      %586 = vset.pattern.permute.xlu0 0
      %587 = vperm.xlu0 %586, %v565
      %v588 = vpop.permute.xlu0 %587
      %591 = vset.pattern.permute.xlu0 0
      %592 = vperm.xlu0 %591, %v566
      %v593 = vpop.permute.xlu0 %592
      %596 = vset.pattern.permute.xlu0 0
      %597 = vperm.xlu0 %596, %v567
      %v598 = vpop.permute.xlu0 %597
      %v600 = vsub.f32 %v544, %v583
      %v601 = vsub.f32 %v545, %v588
      %v602 = vsub.f32 %v546, %v593
      %v603 = vsub.f32 %v547, %v598
      %v604 = vmul.f32 %v600, 1.442695
      %v605 = vpow.pop %v604
      %v606 = vmul.f32 %v601, 1.442695
      %v607 = vpow.pop %v606
      %v608 = vmul.f32 %v602, 1.442695
      %v609 = vpow.pop %v608
      %v610 = vmul.f32 %v603, 1.442695
      %v611 = vpow.pop %v610
      %v612 = vld [vmem:[#allocation3] sm:$0xff]
      %v613 = vld [vmem:[#allocation3 + $0x8] sm:$0xff]
      %v614 = vld [vmem:[#allocation3 + $0x10] sm:$0xff]
      %v615 = vld [vmem:[#allocation3 + $0x18] sm:$0xff]
      %v616 = vmul.f32 %v573, %v612
      %v617 = vmul.f32 %v575, %v613
      %v618 = vmul.f32 %v577, %v614
      %v619 = vmul.f32 %v579, %v615
      %v620 = vsel %vm348, %v605, 0.0
      %621 = vadd.xlane.f32.xlu0 %v620
      %v622 = vpop.xlane.xlu0 %621
      %v623 = vsel %vm348, %v607, 0.0
      %624 = vadd.xlane.f32.xlu0 %v623
      %v625 = vpop.xlane.xlu0 %624
      %v626 = vsel %vm348, %v609, 0.0
      %627 = vadd.xlane.f32.xlu0 %v626
      %v628 = vpop.xlane.xlu0 %627
      %v629 = vsel %vm348, %v611, 0.0
      %630 = vadd.xlane.f32.xlu0 %v629
      %v631 = vpop.xlane.xlu0 %630
      %v632 = vadd.f32 %v616, %v622
      %v633 = vadd.f32 %v617, %v625
      %v634 = vadd.f32 %v618, %v628
      %v635 = vadd.f32 %v619, %v631
      %vm636 = vcmask 7168
      %637 = vst.msk [vmem:[#allocation3] sm:$0xff] %vm636, %v632
      %638 = vst.msk [vmem:[#allocation3 + $0x8] sm:$0xff] %vm636, %v633
      %639 = vst.msk [vmem:[#allocation3 + $0x10] sm:$0xff] %vm636, %v634
      %640 = vst.msk [vmem:[#allocation3 + $0x18] sm:$0xff] %vm636, %v635
      %v641 = vld [vmem:[#allocation4] sm:$0xff]
      %v642 = vld [vmem:[#allocation4 + $0x8] sm:$0xff]
      %v643 = vld [vmem:[#allocation4 + $0x10] sm:$0xff]
      %v644 = vld [vmem:[#allocation4 + $0x18] sm:$0xff]
      %646 = vset.pattern.permute.xlu0 0
      %647 = vperm.xlu0 %646, %v573
      %v648 = vpop.permute.xlu0 %647
      %651 = vset.pattern.permute.xlu0 0
      %652 = vperm.xlu0 %651, %v575
      %v653 = vpop.permute.xlu0 %652
      %656 = vset.pattern.permute.xlu0 0
      %657 = vperm.xlu0 %656, %v577
      %v658 = vpop.permute.xlu0 %657
      %661 = vset.pattern.permute.xlu0 0
      %662 = vperm.xlu0 %661, %v579
      %v663 = vpop.permute.xlu0 %662
      %v665 = vmul.f32 %v648, %v641
      %v666 = vmul.f32 %v653, %v642
      %v667 = vmul.f32 %v658, %v643
      %v668 = vmul.f32 %v663, %v644
      %v669 = vpack.c.bf16 %v605, %v605
      %v670 = vpack.c.bf16 %v607, %v607
      %v671 = vpack.c.bf16 %v609, %v609
      %v672 = vpack.c.bf16 %v611, %v611
      %v673 = vld [vmem:[%s307] sm:$0xf]
      %v674 = vld [vmem:[%s307 + $0x4] sm:$0xf]
      %v675 = vld [vmem:[%s307 + $0x8] sm:$0xf]
      %v676 = vld [vmem:[%s307 + $0xc] sm:$0xf]
      %v678 = vsel %vm348, %v669, 0
      %vm680 = vcmask 1043456
      %v682 = vsel %vm680, %v673, 0
      %684 = vmatprep.subr.bf16.mxu0 0
      %685 = vmatpush1.bf16.msra.mxu0 0
      %686 = vmatprep.subr.bf16.mxu0 0
      %687 = vmatpush1.bf16.msra.mxu0 0
      %688 = vmatprep.subr.bf16.mxu0 0
      %689 = vmatpush1.bf16.msra.mxu0 0
      %690 = vmatprep.subr.bf16.mxu0 0
      %691 = vmatpush1.bf16.msra.mxu0 0
      %692 = vmatprep.subr.bf16.mxu0 0
      %693 = vmatpush1.bf16.msra.mxu0 0
      %694 = vmatprep.subr.bf16.mxu0 0
      %695 = vmatpush1.bf16.msra.mxu0 0
      %696 = vmatprep.subr.bf16.mxu0 0
      %697 = vmatpush1.bf16.msra.mxu0 0
      %698 = vmatprep.subr.bf16.mxu0 0
      %699 = vmatpush1.bf16.msra.mxu0 %v682
      %700 = vmatprep.subr.bf16.mxu0 0
      %701 = vmatpush2.bf16.msra.mxu0 0
      %702 = vmatprep.subr.bf16.mxu0 0
      %703 = vmatpush2.bf16.msra.mxu0 0
      %704 = vmatprep.subr.bf16.mxu0 0
      %705 = vmatpush2.bf16.msra.mxu0 0
      %706 = vmatprep.subr.bf16.mxu0 0
      %707 = vmatpush2.bf16.msra.mxu0 0
      %708 = vmatprep.subr.bf16.mxu0 0
      %709 = vmatpush2.bf16.msra.mxu0 0
      %710 = vmatprep.subr.bf16.mxu0 0
      %711 = vmatpush2.bf16.msra.mxu0 0
      %712 = vmatprep.subr.bf16.mxu0 0
      %713 = vmatpush2.bf16.msra.mxu0 0
      %714 = vmatprep.subr.bf16.mxu0 0
      %715 = vmatpush2.bf16.msra.mxu0 0
      %716 = vmatprep.mubr.bf16.mxu0 0
      %717 = vmatmul.mubr.bf16.gmra.mxu0 %v678
      %v718 = vpop.f32.mrf.mxu0
      %v719 = vadd.f32 0.0, %v718
      %v720 = vpop.f32.mrf.mxu0
      %v721 = vpop.f32.mrf.mxu0
      %v722 = vpop.f32.mrf.mxu0
      %723 = vdwg.mxu0
      %v725 = vsel %vm348, %v670, 0
      %v728 = vsel %vm680, %v674, 0
      %730 = vmatprep.subr.bf16.mxu0 0
      %731 = vmatpush1.bf16.msra.mxu0 0
      %732 = vmatprep.subr.bf16.mxu0 0
      %733 = vmatpush1.bf16.msra.mxu0 0
      %734 = vmatprep.subr.bf16.mxu0 0
      %735 = vmatpush1.bf16.msra.mxu0 0
      %736 = vmatprep.subr.bf16.mxu0 0
      %737 = vmatpush1.bf16.msra.mxu0 0
      %738 = vmatprep.subr.bf16.mxu0 0
      %739 = vmatpush1.bf16.msra.mxu0 0
      %740 = vmatprep.subr.bf16.mxu0 0
      %741 = vmatpush1.bf16.msra.mxu0 0
      %742 = vmatprep.subr.bf16.mxu0 0
      %743 = vmatpush1.bf16.msra.mxu0 0
      %744 = vmatprep.subr.bf16.mxu0 0
      %745 = vmatpush1.bf16.msra.mxu0 %v728
      %746 = vmatprep.subr.bf16.mxu0 0
      %747 = vmatpush2.bf16.msra.mxu0 0
      %748 = vmatprep.subr.bf16.mxu0 0
      %749 = vmatpush2.bf16.msra.mxu0 0
      %750 = vmatprep.subr.bf16.mxu0 0
      %751 = vmatpush2.bf16.msra.mxu0 0
      %752 = vmatprep.subr.bf16.mxu0 0
      %753 = vmatpush2.bf16.msra.mxu0 0
      %754 = vmatprep.subr.bf16.mxu0 0
      %755 = vmatpush2.bf16.msra.mxu0 0
      %756 = vmatprep.subr.bf16.mxu0 0
      %757 = vmatpush2.bf16.msra.mxu0 0
      %758 = vmatprep.subr.bf16.mxu0 0
      %759 = vmatpush2.bf16.msra.mxu0 0
      %760 = vmatprep.subr.bf16.mxu0 0
      %761 = vmatpush2.bf16.msra.mxu0 0
      %762 = vmatprep.mubr.bf16.mxu0 0
      %763 = vmatmul.mubr.bf16.gmra.mxu0 %v725
      %v764 = vpop.f32.mrf.mxu0
      %v765 = vadd.f32 0.0, %v764
      %v766 = vpop.f32.mrf.mxu0
      %v767 = vpop.f32.mrf.mxu0
      %v768 = vpop.f32.mrf.mxu0
      %769 = vdwg.mxu0
      %v771 = vsel %vm348, %v671, 0
      %v774 = vsel %vm680, %v675, 0
      %776 = vmatprep.subr.bf16.mxu0 0
      %777 = vmatpush1.bf16.msra.mxu0 0
      %778 = vmatprep.subr.bf16.mxu0 0
      %779 = vmatpush1.bf16.msra.mxu0 0
      %780 = vmatprep.subr.bf16.mxu0 0
      %781 = vmatpush1.bf16.msra.mxu0 0
      %782 = vmatprep.subr.bf16.mxu0 0
      %783 = vmatpush1.bf16.msra.mxu0 0
      %784 = vmatprep.subr.bf16.mxu0 0
      %785 = vmatpush1.bf16.msra.mxu0 0
      %786 = vmatprep.subr.bf16.mxu0 0
      %787 = vmatpush1.bf16.msra.mxu0 0
      %788 = vmatprep.subr.bf16.mxu0 0
      %789 = vmatpush1.bf16.msra.mxu0 0
      %790 = vmatprep.subr.bf16.mxu0 0
      %791 = vmatpush1.bf16.msra.mxu0 %v774
      %792 = vmatprep.subr.bf16.mxu0 0
      %793 = vmatpush2.bf16.msra.mxu0 0
      %794 = vmatprep.subr.bf16.mxu0 0
      %795 = vmatpush2.bf16.msra.mxu0 0
      %796 = vmatprep.subr.bf16.mxu0 0
      %797 = vmatpush2.bf16.msra.mxu0 0
      %798 = vmatprep.subr.bf16.mxu0 0
      %799 = vmatpush2.bf16.msra.mxu0 0
      %800 = vmatprep.subr.bf16.mxu0 0
      %801 = vmatpush2.bf16.msra.mxu0 0
      %802 = vmatprep.subr.bf16.mxu0 0
      %803 = vmatpush2.bf16.msra.mxu0 0
      %804 = vmatprep.subr.bf16.mxu0 0
      %805 = vmatpush2.bf16.msra.mxu0 0
      %806 = vmatprep.subr.bf16.mxu0 0
      %807 = vmatpush2.bf16.msra.mxu0 0
      %808 = vmatprep.mubr.bf16.mxu0 0
      %809 = vmatmul.mubr.bf16.gmra.mxu0 %v771
      %v810 = vpop.f32.mrf.mxu0
      %v811 = vadd.f32 0.0, %v810
      %v812 = vpop.f32.mrf.mxu0
      %v813 = vpop.f32.mrf.mxu0
      %v814 = vpop.f32.mrf.mxu0
      %815 = vdwg.mxu0
      %v817 = vsel %vm348, %v672, 0
      %v820 = vsel %vm680, %v676, 0
      %822 = vmatprep.subr.bf16.mxu0 0
      %823 = vmatpush1.bf16.msra.mxu0 0
      %824 = vmatprep.subr.bf16.mxu0 0
      %825 = vmatpush1.bf16.msra.mxu0 0
      %826 = vmatprep.subr.bf16.mxu0 0
      %827 = vmatpush1.bf16.msra.mxu0 0
      %828 = vmatprep.subr.bf16.mxu0 0
      %829 = vmatpush1.bf16.msra.mxu0 0
      %830 = vmatprep.subr.bf16.mxu0 0
      %831 = vmatpush1.bf16.msra.mxu0 0
      %832 = vmatprep.subr.bf16.mxu0 0
      %833 = vmatpush1.bf16.msra.mxu0 0
      %834 = vmatprep.subr.bf16.mxu0 0
      %835 = vmatpush1.bf16.msra.mxu0 0
      %836 = vmatprep.subr.bf16.mxu0 0
      %837 = vmatpush1.bf16.msra.mxu0 %v820
      %838 = vmatprep.subr.bf16.mxu0 0
      %839 = vmatpush2.bf16.msra.mxu0 0
      %840 = vmatprep.subr.bf16.mxu0 0
      %841 = vmatpush2.bf16.msra.mxu0 0
      %842 = vmatprep.subr.bf16.mxu0 0
      %843 = vmatpush2.bf16.msra.mxu0 0
      %844 = vmatprep.subr.bf16.mxu0 0
      %845 = vmatpush2.bf16.msra.mxu0 0
      %846 = vmatprep.subr.bf16.mxu0 0
      %847 = vmatpush2.bf16.msra.mxu0 0
      %848 = vmatprep.subr.bf16.mxu0 0
      %849 = vmatpush2.bf16.msra.mxu0 0
      %850 = vmatprep.subr.bf16.mxu0 0
      %851 = vmatpush2.bf16.msra.mxu0 0
      %852 = vmatprep.subr.bf16.mxu0 0
      %853 = vmatpush2.bf16.msra.mxu0 0
      %854 = vmatprep.mubr.bf16.mxu0 0
      %855 = vmatmul.mubr.bf16.gmra.mxu0 %v817
      %v856 = vpop.f32.mrf.mxu0
      %v857 = vadd.f32 0.0, %v856
      %v858 = vpop.f32.mrf.mxu0
      %v859 = vpop.f32.mrf.mxu0
      %v860 = vpop.f32.mrf.mxu0
      %861 = vdwg.mxu0
      %v862 = vadd.f32 %v665, %v719
      %v863 = vadd.f32 %v666, %v765
      %v864 = vadd.f32 %v667, %v811
      %v865 = vadd.f32 %v668, %v857
      %866 = vst.msk [vmem:[#allocation4] sm:$0xff] %vm348, %v862
      %867 = vst.msk [vmem:[#allocation4 + $0x8] sm:$0xff] %vm348, %v863
      %868 = vst.msk [vmem:[#allocation4 + $0x10] sm:$0xff] %vm348, %v864
      %869 = vst.msk [vmem:[#allocation4 + $0x18] sm:$0xff] %vm348, %v865
      %870 = vst.msk [vmem:[#allocation2] sm:$0xff] %vm636, %v564
      %871 = vst.msk [vmem:[#allocation2 + $0x8] sm:$0xff] %vm636, %v565
      %872 = vst.msk [vmem:[#allocation2 + $0x10] sm:$0xff] %vm636, %v566
      %873 = vst.msk [vmem:[#allocation2 + $0x18] sm:$0xff] %vm636, %v567
      // Predicated region
      $region41: #{graph_encoder_forward.13} parent=35 // pred_check
        %p874 = pneg %p322
      $region42: #{graph_encoder_forward.13} parent=35 // pred_check_branch
        %876 = sbr.rel (%p874) target = $region44
      $region43: #{graph_encoder_forward.13} parent=35 // pred_region
        %v877 = vld [vmem:[#allocation4] sm:$0xff]
        %v878 = vld [vmem:[#allocation4 + $0x8] sm:$0xff]
        %v879 = vld [vmem:[#allocation4 + $0x10] sm:$0xff]
        %v880 = vld [vmem:[#allocation4 + $0x18] sm:$0xff]
        %v881 = vld [vmem:[#allocation3] sm:$0xff]
        %v882 = vld [vmem:[#allocation3 + $0x8] sm:$0xff]
        %v883 = vld [vmem:[#allocation3 + $0x10] sm:$0xff]
        %v884 = vld [vmem:[#allocation3 + $0x18] sm:$0xff]
        %v885 = vrcp.pop %v881
        %v886 = vrcp.pop %v882
        %v887 = vrcp.pop %v883
        %v888 = vrcp.pop %v884
        %890 = vset.pattern.permute.xlu0 0
        %891 = vperm.xlu0 %890, %v885
        %v892 = vpop.permute.xlu0 %891
        %895 = vset.pattern.permute.xlu0 0
        %896 = vperm.xlu0 %895, %v886
        %v897 = vpop.permute.xlu0 %896
        %900 = vset.pattern.permute.xlu0 0
        %901 = vperm.xlu0 %900, %v887
        %v902 = vpop.permute.xlu0 %901
        %905 = vset.pattern.permute.xlu0 0
        %906 = vperm.xlu0 %905, %v888
        %v907 = vpop.permute.xlu0 %906
        %v909 = vmul.f32 %v877, %v892
        %v910 = vmul.f32 %v878, %v897
        %v911 = vmul.f32 %v879, %v902
        %v912 = vmul.f32 %v880, %v907
        %914 = vrot.lane.b32.xlu0 %v910, 8
        %v915 = vpop.permute.xlu0 %914
        %918 = vrot.lane.b32.xlu0 %v911, 16
        %v919 = vpop.permute.xlu0 %918
        %922 = vrot.lane.b32.xlu0 %v912, 24
        %v923 = vpop.permute.xlu0 %922
        %v925 = vsel %vm348, %v909, %v915
        %vm926 = vcmask 130048
        %v927 = vsel %vm926, %v925, %v919
        %vm928 = vcmask 195584
        %v929 = vsel %vm928, %v927, %v923
        %v930 = vpack.c.bf16 %v929, %v929
        %vm931 = vcmask 257024
        %932 = vst.msk [vmem:[%s320] sm:$0xf] %vm931, %v930
      $region44: #{graph_encoder_forward.13} parent=35 // pred_fallthru
        _
      %p933 = scmp.lt.s32.totalorder %s20, 1
      %s934 = scalar_select %p933, %s20, 1
      %p935 = scmp.lt.s32.totalorder %s21, 0
      %s936 = scalar_select %p935, %s21, 0
      %s937 = sadd.s32 %s936, %s934
      %s938 = smul.addr %s937, 4
      %s939 = scalar_lea.vmem %s4, %s938
      // Predicated region
      $region45: #{graph_encoder_forward.13} parent=35 // pred_check
        %p940 = pneg %p166
      $region46: #{graph_encoder_forward.13} parent=35 // pred_check_branch
        %942 = sbr.rel (%p940) target = $region48
      $region47: #{graph_encoder_forward.13} parent=35 // pred_region
        _
      $region48: #{graph_encoder_forward.13} parent=35 // pred_fallthru
        _
    $region36: #{graph_encoder_forward.13} parent=5 // pred_fallthru
      _
    %p943 = scmp.le.s32.totalorder 2, %s10
    // Predicated region
    $region49: #{graph_encoder_forward.13} parent=5 // pred_check
      %p944 = pneg %p943
    $region50: #{graph_encoder_forward.13} parent=5 // pred_check_branch
      %946 = sbr.rel (%p944) target = $region52
    $region51: #{graph_encoder_forward.13} parent=5 // pred_region
      %s947 = ssub.s32 %s10, 2
      // Predicated region
      $region53: #{graph_encoder_forward.13} parent=51 // pred_check
        %p948 = pneg %p172
      $region54: #{graph_encoder_forward.13} parent=51 // pred_check_branch
        %950 = sbr.rel (%p948) target = $region56
      $region55: #{graph_encoder_forward.13} parent=51 // pred_region
        %p951 = scmp.lt.s32.totalorder %s23, 1
        %s952 = scalar_select %p951, %s23, 1
        %p953 = scmp.lt.s32.totalorder %s24, 0
        %s954 = scalar_select %p953, %s24, 0
        %s955 = sadd.s32 %s954, %s952
        %s956 = smul.addr %s955, 4
        %s957 = scalar_lea.vmem %s4, %s956
      $region56: #{graph_encoder_forward.13} parent=51 // pred_fallthru
        _
    $region52: #{graph_encoder_forward.13} parent=5 // pred_fallthru
      _
  $region6: #{graph_encoder_forward.13} parent=0 // loop_footer
    %s14 = sadd.s32 1, %s10
  $region7: #{graph_encoder_forward.13} parent=0 // loop_footer_branch
    %9 = sbr.rel target = $region3
  $region8: #{graph_encoder_forward.13} parent=0 // loop_exit
    _

// kernel: graph_encoder_forward.15
$region0: #{graph_encoder_forward.15}
  #allocation0 [shape = 'u32[]', space=smem, size = 0x4, offset = 0x4, fixed_abs, tag = 'smem constant byte address 0x4 - core index']
  #allocation1 [shape = 'u32[144,128]{1,0:T(1,128)}', space=vmem, size = 0x12000, scoped, tag = 'internal scratch']
  #allocation2 [shape = 'f32[16,64]{1,0:T(8,128)}', space=vmem, size = 0x2000, scoped, tag = 'scratch operand']
  %s0 = inlined_call_operand.vmem [shape: bf16[16,32], index: 0, kind: input, shape index: {}]
  %s1 = inlined_call_operand.vmem [shape: bf16[32,64], index: 1, kind: input, shape index: {}]
  %s2 = inlined_call_operand.vmem [shape: f32[1,64], index: 2, kind: input, shape index: {}]
  %s3 = inlined_call_operand.vmem [shape: bf16[16,64], index: 3, kind: output, shape index: {}]
  %s4 = sld [smem:[#allocation0]]
  $region30: #{graph_encoder_forward.15} parent=0
    _
  %s6 = ssub.s32 1, %s4
  %s7 = scalar_select 0, %s6, %s4
  // Predicated region
  $region2: #{graph_encoder_forward.15} parent=0 // pred_check
    _
  $region3: #{graph_encoder_forward.15} parent=0 // pred_check_branch
    %9 = sbr.rel (0) target = $region5
  $region4: #{graph_encoder_forward.15} parent=0 // pred_region
    _
  $region5: #{graph_encoder_forward.15} parent=0 // pred_fallthru
    _
  // Predicated region
  $region6: #{graph_encoder_forward.15} parent=0 // pred_check
    _
  $region7: #{graph_encoder_forward.15} parent=0 // pred_check_branch
    %11 = sbr.rel (0) target = $region9
  $region8: #{graph_encoder_forward.15} parent=0 // pred_region
    _
  $region9: #{graph_encoder_forward.15} parent=0 // pred_fallthru
    _
  // Predicated region
  $region10: #{graph_encoder_forward.15} parent=0 // pred_check
    _
  $region11: #{graph_encoder_forward.15} parent=0 // pred_check_branch
    %13 = sbr.rel (0) target = $region13
  $region12: #{graph_encoder_forward.15} parent=0 // pred_region
    _
  $region13: #{graph_encoder_forward.15} parent=0 // pred_fallthru
    _
  %p15 = scmp.eq.s32.totalorder 0, 0
  // Predicated region
  $region14: #{graph_encoder_forward.15} parent=0 // pred_check
    %p16 = pneg %p15
  $region15: #{graph_encoder_forward.15} parent=0 // pred_check_branch
    %18 = sbr.rel (%p16) target = $region17
  $region16: #{graph_encoder_forward.15} parent=0 // pred_region
    %vm19 = vcmask 523264
    %20 = vst.msk [vmem:[#allocation2] sm:$0xff] %vm19, 0.0
    %21 = vst.msk [vmem:[#allocation2 + $0x8] sm:$0xff] %vm19, 0.0
  $region17: #{graph_encoder_forward.15} parent=0 // pred_fallthru
    _
  %v22 = vld [vmem:[#allocation2] sm:$0xff]
  %v23 = vld [vmem:[#allocation2 + $0x8] sm:$0xff]
  %v24 = vld [vmem:[%s0] sm:$0xf]
  %v25 = vld [vmem:[%s0 + $0x4] sm:$0xf]
  %v26 = vld [vmem:[%s1] sm:$0xf]
  %v27 = vld [vmem:[%s1 + $0x4] sm:$0xf]
  %v28 = vld [vmem:[%s1 + $0x8] sm:$0xf]
  %v29 = vld [vmem:[%s1 + $0xc] sm:$0xf]
  %v32 = vunpack.c.l.b16 %v24
  %v33 = vunpack.c.l.b16 %v25
  %v34 = vpack.c.b16 %v33, %v32
  %v39 = vunpack.c.l.b16 %v26
  %v40 = vunpack.c.l.b16 %v27
  %v41 = vunpack.c.l.b16 %v28
  %v42 = vunpack.c.l.b16 %v29
  %v43 = vpack.c.b16 %v40, %v39
  %v44 = vpack.c.b16 %v42, %v41
  %vm47 = vcmask 261120
  %v49 = vsel %vm47, %v34, 0
  %51 = vmatprep.subr.bf16.mxu0 0
  %52 = vmatpush1.bf16.msra.mxu0 0
  %53 = vmatprep.subr.bf16.mxu0 0
  %54 = vmatpush1.bf16.msra.mxu0 0
  %55 = vmatprep.subr.bf16.mxu0 0
  %56 = vmatpush1.bf16.msra.mxu0 0
  %57 = vmatprep.subr.bf16.mxu0 0
  %58 = vmatpush1.bf16.msra.mxu0 0
  %59 = vmatprep.subr.bf16.mxu0 0
  %60 = vmatpush1.bf16.msra.mxu0 0
  %61 = vmatprep.subr.bf16.mxu0 0
  %62 = vmatpush1.bf16.msra.mxu0 0
  %63 = vmatprep.subr.bf16.mxu0 0
  %64 = vmatpush1.bf16.msra.mxu0 %v44
  %65 = vmatprep.subr.bf16.mxu0 0
  %66 = vmatpush1.bf16.msra.mxu0 %v43
  %67 = vmatprep.subr.bf16.mxu0 0
  %68 = vmatpush2.bf16.msra.mxu0 0
  %69 = vmatprep.subr.bf16.mxu0 0
  %70 = vmatpush2.bf16.msra.mxu0 0
  %71 = vmatprep.subr.bf16.mxu0 0
  %72 = vmatpush2.bf16.msra.mxu0 0
  %73 = vmatprep.subr.bf16.mxu0 0
  %74 = vmatpush2.bf16.msra.mxu0 0
  %75 = vmatprep.subr.bf16.mxu0 0
  %76 = vmatpush2.bf16.msra.mxu0 0
  %77 = vmatprep.subr.bf16.mxu0 0
  %78 = vmatpush2.bf16.msra.mxu0 0
  %79 = vmatprep.subr.bf16.mxu0 0
  %80 = vmatpush2.bf16.msra.mxu0 0
  %81 = vmatprep.subr.bf16.mxu0 0
  %82 = vmatpush2.bf16.msra.mxu0 0
  %83 = vmatprep.mubr.bf16.mxu0 0
  %84 = vmatmul.mubr.bf16.gmra.mxu0 %v49
  %v85 = vpop.f32.mrf.mxu0
  %v86 = vadd.f32 0.0, %v85
  %v87 = vpop.f32.mrf.mxu0
  %v88 = vpop.f32.mrf.mxu0
  %v89 = vadd.f32 0.0, %v88
  %v90 = vpop.f32.mrf.mxu0
  %91 = vdwg.mxu0
  %v92 = vadd.f32 %v22, %v86
  %v93 = vadd.f32 %v23, %v89
  %vm94 = vcmask 523264
  %95 = vst.msk [vmem:[#allocation2] sm:$0xff] %vm94, %v92
  %96 = vst.msk [vmem:[#allocation2 + $0x8] sm:$0xff] %vm94, %v93
  // Predicated region
  $region18: #{graph_encoder_forward.15} parent=0 // pred_check
    %p97 = pneg %p15
  $region19: #{graph_encoder_forward.15} parent=0 // pred_check_branch
    %99 = sbr.rel (%p97) target = $region21
  $region20: #{graph_encoder_forward.15} parent=0 // pred_region
    %v100 = vld [vmem:[#allocation2] sm:$0xff]
    %v101 = vld [vmem:[#allocation2 + $0x8] sm:$0xff]
    %v102 = vld [vmem:[%s2] sm:$0x1]
    %v104 = vlaneseq
    %v105 = vshrl.u32 %v104, 7
    %v106 = vsub.s32 0, %v105
    %v107 = vrot.slane %v102, %v106
    %v109 = vadd.f32 %v100, %v107
    %v110 = vadd.f32 %v101, %v107
    %v111 = vmul.f32 %v109, 0.5
    %v112 = vmul.f32 %v110, 0.5
    %v113 = vmul.f32 %v109, 0.044715
    %v114 = vmul.f32 %v110, 0.044715
    %v115 = vmul.f32 %v113, %v109
    %v116 = vmul.f32 %v114, %v110
    %v117 = vmul.f32 %v115, %v109
    %v118 = vmul.f32 %v116, %v110
    %v119 = vadd.f32 %v109, %v117
    %v120 = vadd.f32 %v110, %v118
    %v121 = vmul.f32 %v119, 0.7978846
    %v122 = vmul.f32 %v120, 0.7978846
    %v123 = vtanh.pop %v121
    %v124 = vtanh.pop %v122
    %v125 = vadd.f32 %v123, 1.0
    %v126 = vadd.f32 %v124, 1.0
    %v127 = vmul.f32 %v111, %v125
    %v128 = vmul.f32 %v112, %v126
    %v129 = vpack.c.bf16 %v128, %v127
    %v131 = vunpack.c.l.b16 %v129
    %v132 = vunpack.c.h.b16 %v129
    %v133 = vpack.c.b16 %v131, %v131
    %v134 = vpack.c.b16 %v132, %v132
    %vm137 = vcmask 519168
    %138 = vst.msk [vmem:[%s3] sm:$0xf] %vm137, %v133
    %139 = vst.msk [vmem:[%s3 + $0x4] sm:$0xf] %vm137, %v134
  $region21: #{graph_encoder_forward.15} parent=0 // pred_fallthru
    _
  // Predicated region
  $region22: #{graph_encoder_forward.15} parent=0 // pred_check
    _
  $region23: #{graph_encoder_forward.15} parent=0 // pred_check_branch
    %141 = sbr.rel (0) target = $region25
  $region24: #{graph_encoder_forward.15} parent=0 // pred_region
    _
  $region25: #{graph_encoder_forward.15} parent=0 // pred_fallthru
    _
  // Predicated region
  $region26: #{graph_encoder_forward.15} parent=0 // pred_check
    _
  $region27: #{graph_encoder_forward.15} parent=0 // pred_check_branch
    %143 = sbr.rel (0) target = $region29
  $region28: #{graph_encoder_forward.15} parent=0 // pred_region
    _
  $region29: #{graph_encoder_forward.15} parent=0 // pred_fallthru
    _

// kernel: graph_encoder_forward.16
$region0: #{graph_encoder_forward.16}
  #allocation0 [shape = 'u32[]', space=smem, size = 0x4, offset = 0x4, fixed_abs, tag = 'smem constant byte address 0x4 - core index']
  #allocation1 [shape = 'u32[144,128]{1,0:T(1,128)}', space=vmem, size = 0x12000, scoped, tag = 'internal scratch']
  #allocation2 [shape = 'f32[16,32]{1,0:T(8,128)}', space=vmem, size = 0x2000, scoped, tag = 'scratch operand']
  %s0 = inlined_call_operand.vmem [shape: bf16[16,64], index: 0, kind: input, shape index: {}]
  %s1 = inlined_call_operand.vmem [shape: bf16[64,32], index: 1, kind: input, shape index: {}]
  %s2 = inlined_call_operand.vmem [shape: f32[1,32], index: 2, kind: input, shape index: {}]
  %s3 = inlined_call_operand.vmem [shape: bf16[16,32], index: 3, kind: input, shape index: {}]
  %s4 = inlined_call_operand.vmem [shape: f32[1,32], index: 4, kind: input, shape index: {}]
  %s5 = inlined_call_operand.vmem [shape: f32[1,32], index: 5, kind: input, shape index: {}]
  %s6 = inlined_call_operand.vmem [shape: bf16[16,32], index: 6, kind: output, shape index: {}]
  %s7 = sld [smem:[#allocation0]]
  $region42: #{graph_encoder_forward.16} parent=0
    _
  %s9 = ssub.s32 1, %s7
  %s10 = scalar_select 0, %s9, %s7
  // Predicated region
  $region2: #{graph_encoder_forward.16} parent=0 // pred_check
    _
  $region3: #{graph_encoder_forward.16} parent=0 // pred_check_branch
    %12 = sbr.rel (0) target = $region5
  $region4: #{graph_encoder_forward.16} parent=0 // pred_region
    _
  $region5: #{graph_encoder_forward.16} parent=0 // pred_fallthru
    _
  // Predicated region
  $region6: #{graph_encoder_forward.16} parent=0 // pred_check
    _
  $region7: #{graph_encoder_forward.16} parent=0 // pred_check_branch
    %14 = sbr.rel (0) target = $region9
  $region8: #{graph_encoder_forward.16} parent=0 // pred_region
    _
  $region9: #{graph_encoder_forward.16} parent=0 // pred_fallthru
    _
  // Predicated region
  $region10: #{graph_encoder_forward.16} parent=0 // pred_check
    _
  $region11: #{graph_encoder_forward.16} parent=0 // pred_check_branch
    %16 = sbr.rel (0) target = $region13
  $region12: #{graph_encoder_forward.16} parent=0 // pred_region
    _
  $region13: #{graph_encoder_forward.16} parent=0 // pred_fallthru
    _
  // Predicated region
  $region14: #{graph_encoder_forward.16} parent=0 // pred_check
    _
  $region15: #{graph_encoder_forward.16} parent=0 // pred_check_branch
    %18 = sbr.rel (0) target = $region17
  $region16: #{graph_encoder_forward.16} parent=0 // pred_region
    _
  $region17: #{graph_encoder_forward.16} parent=0 // pred_fallthru
    _
  // Predicated region
  $region18: #{graph_encoder_forward.16} parent=0 // pred_check
    _
  $region19: #{graph_encoder_forward.16} parent=0 // pred_check_branch
    %20 = sbr.rel (0) target = $region21
  $region20: #{graph_encoder_forward.16} parent=0 // pred_region
    _
  $region21: #{graph_encoder_forward.16} parent=0 // pred_fallthru
    _
  // Predicated region
  $region22: #{graph_encoder_forward.16} parent=0 // pred_check
    _
  $region23: #{graph_encoder_forward.16} parent=0 // pred_check_branch
    %22 = sbr.rel (0) target = $region25
  $region24: #{graph_encoder_forward.16} parent=0 // pred_region
    _
  $region25: #{graph_encoder_forward.16} parent=0 // pred_fallthru
    _
  %p24 = scmp.eq.s32.totalorder 0, 0
  // Predicated region
  $region26: #{graph_encoder_forward.16} parent=0 // pred_check
    %p25 = pneg %p24
  $region27: #{graph_encoder_forward.16} parent=0 // pred_check_branch
    %27 = sbr.rel (%p25) target = $region29
  $region28: #{graph_encoder_forward.16} parent=0 // pred_region
    %vm28 = vcmask 261120
    %29 = vst.msk [vmem:[#allocation2] sm:$0xff] %vm28, 0.0
    %30 = vst.msk [vmem:[#allocation2 + $0x8] sm:$0xff] %vm28, 0.0
  $region29: #{graph_encoder_forward.16} parent=0 // pred_fallthru
    _
  %v31 = vld [vmem:[#allocation2] sm:$0xff]
  %v32 = vld [vmem:[#allocation2 + $0x8] sm:$0xff]
  %v33 = vld [vmem:[%s0] sm:$0xf]
  %v34 = vld [vmem:[%s0 + $0x4] sm:$0xf]
  %v35 = vld [vmem:[%s1] sm:$0xf]
  %v36 = vld [vmem:[%s1 + $0x4] sm:$0xf]
  %v37 = vld [vmem:[%s1 + $0x8] sm:$0xf]
  %v38 = vld [vmem:[%s1 + $0xc] sm:$0xf]
  %v39 = vld [vmem:[%s1 + $0x10] sm:$0xf]
  %v40 = vld [vmem:[%s1 + $0x14] sm:$0xf]
  %v41 = vld [vmem:[%s1 + $0x18] sm:$0xf]
  %v42 = vld [vmem:[%s1 + $0x1c] sm:$0xf]
  %v45 = vunpack.c.l.b16 %v33
  %v46 = vunpack.c.l.b16 %v34
  %v47 = vpack.c.b16 %v46, %v45
  %v56 = vunpack.c.l.b16 %v35
  %v57 = vunpack.c.l.b16 %v36
  %v58 = vunpack.c.l.b16 %v37
  %v59 = vunpack.c.l.b16 %v38
  %v60 = vunpack.c.l.b16 %v39
  %v61 = vunpack.c.l.b16 %v40
  %v62 = vunpack.c.l.b16 %v41
  %v63 = vunpack.c.l.b16 %v42
  %v64 = vpack.c.b16 %v57, %v56
  %v65 = vpack.c.b16 %v59, %v58
  %v66 = vpack.c.b16 %v61, %v60
  %v67 = vpack.c.b16 %v63, %v62
  %vm72 = vcmask 523264
  %v74 = vsel %vm72, %v47, 0
  %76 = vmatprep.subr.bf16.mxu0 0
  %77 = vmatpush1.bf16.msra.mxu0 0
  %78 = vmatprep.subr.bf16.mxu0 0
  %79 = vmatpush1.bf16.msra.mxu0 0
  %80 = vmatprep.subr.bf16.mxu0 0
  %81 = vmatpush1.bf16.msra.mxu0 0
  %82 = vmatprep.subr.bf16.mxu0 0
  %83 = vmatpush1.bf16.msra.mxu0 0
  %84 = vmatprep.subr.bf16.mxu0 0
  %85 = vmatpush1.bf16.msra.mxu0 %v67
  %86 = vmatprep.subr.bf16.mxu0 0
  %87 = vmatpush1.bf16.msra.mxu0 %v66
  %88 = vmatprep.subr.bf16.mxu0 0
  %89 = vmatpush1.bf16.msra.mxu0 %v65
  %90 = vmatprep.subr.bf16.mxu0 0
  %91 = vmatpush1.bf16.msra.mxu0 %v64
  %92 = vmatprep.subr.bf16.mxu0 0
  %93 = vmatpush2.bf16.msra.mxu0 0
  %94 = vmatprep.subr.bf16.mxu0 0
  %95 = vmatpush2.bf16.msra.mxu0 0
  %96 = vmatprep.subr.bf16.mxu0 0
  %97 = vmatpush2.bf16.msra.mxu0 0
  %98 = vmatprep.subr.bf16.mxu0 0
  %99 = vmatpush2.bf16.msra.mxu0 0
  %100 = vmatprep.subr.bf16.mxu0 0
  %101 = vmatpush2.bf16.msra.mxu0 0
  %102 = vmatprep.subr.bf16.mxu0 0
  %103 = vmatpush2.bf16.msra.mxu0 0
  %104 = vmatprep.subr.bf16.mxu0 0
  %105 = vmatpush2.bf16.msra.mxu0 0
  %106 = vmatprep.subr.bf16.mxu0 0
  %107 = vmatpush2.bf16.msra.mxu0 0
  %108 = vmatprep.mubr.bf16.mxu0 0
  %109 = vmatmul.mubr.bf16.gmra.mxu0 %v74
  %v110 = vpop.f32.mrf.mxu0
  %v111 = vadd.f32 0.0, %v110
  %v112 = vpop.f32.mrf.mxu0
  %v113 = vpop.f32.mrf.mxu0
  %v114 = vadd.f32 0.0, %v113
  %v115 = vpop.f32.mrf.mxu0
  %116 = vdwg.mxu0
  %v117 = vadd.f32 %v31, %v111
  %v118 = vadd.f32 %v32, %v114
  %vm119 = vcmask 261120
  %120 = vst.msk [vmem:[#allocation2] sm:$0xff] %vm119, %v117
  %121 = vst.msk [vmem:[#allocation2 + $0x8] sm:$0xff] %vm119, %v118
  // Predicated region
  $region30: #{graph_encoder_forward.16} parent=0 // pred_check
    %p122 = pneg %p24
  $region31: #{graph_encoder_forward.16} parent=0 // pred_check_branch
    %124 = sbr.rel (%p122) target = $region33
  $region32: #{graph_encoder_forward.16} parent=0 // pred_region
    %v125 = vld [vmem:[#allocation2] sm:$0xff]
    %v126 = vld [vmem:[#allocation2 + $0x8] sm:$0xff]
    %v127 = vld [vmem:[%s2] sm:$0x1]
    %v129 = vlaneseq
    %v130 = vshrl.u32 %v129, 7
    %v131 = vsub.s32 0, %v130
    %v132 = vrot.slane %v127, %v131
    %v134 = vadd.f32 %v125, %v132
    %v135 = vadd.f32 %v126, %v132
    %v136 = vld [vmem:[%s3] sm:$0xf]
    %v137 = vld [vmem:[%s3 + $0x4] sm:$0xf]
    %v138 = vunpack.c.l.bf16 %v136
    %v139 = vunpack.c.l.bf16 %v137
    %v140 = vadd.f32 %v134, %v138
    %v141 = vadd.f32 %v135, %v139
    %v142 = vsel %vm119, %v140, 0.0
    %143 = vadd.xlane.f32.xlu0 %v142
    %v144 = vpop.xlane.xlu0 %143
    %v145 = vsel %vm119, %v141, 0.0
    %146 = vadd.xlane.f32.xlu0 %v145
    %v147 = vpop.xlane.xlu0 %146
    %v148 = vrcp.pop 32.0
    %v149 = vmul.f32 %v144, %v148
    %v150 = vmul.f32 %v147, %v148
    %v151 = vsub.f32 %v140, %v149
    %v152 = vsub.f32 %v141, %v150
    %v153 = vmul.f32 %v151, %v151
    %v154 = vmul.f32 %v152, %v152
    %v155 = vsel %vm119, %v153, 0.0
    %156 = vadd.xlane.f32.xlu0 %v155
    %v157 = vpop.xlane.xlu0 %156
    %v158 = vsel %vm119, %v154, 0.0
    %159 = vadd.xlane.f32.xlu0 %v158
    %v160 = vpop.xlane.xlu0 %159
    %v161 = vmul.f32 %v157, %v148
    %v162 = vmul.f32 %v160, %v148
    %v163 = vld [vmem:[%s4] sm:$0x1]
    %v164 = vadd.f32 %v161, 1e-12
    %v165 = vadd.f32 %v162, 1e-12
    %v166 = vrsqrt.pop %v164
    %v167 = vrsqrt.pop %v165
    %v168 = vmul.f32 %v151, %v166
    %v169 = vmul.f32 %v152, %v167
    %v171 = vlaneseq
    %v172 = vshrl.u32 %v171, 7
    %v173 = vsub.s32 0, %v172
    %v174 = vrot.slane %v163, %v173
    %v176 = vmul.f32 %v174, %v168
    %v177 = vmul.f32 %v174, %v169
    %v178 = vld [vmem:[%s5] sm:$0x1]
    %v180 = vlaneseq
    %v181 = vshrl.u32 %v180, 7
    %v182 = vsub.s32 0, %v181
    %v183 = vrot.slane %v178, %v182
    %v185 = vadd.f32 %v176, %v183
    %v186 = vadd.f32 %v177, %v183
    %v187 = vpack.c.bf16 %v186, %v185
    %v189 = vunpack.c.l.b16 %v187
    %v190 = vunpack.c.h.b16 %v187
    %v191 = vpack.c.b16 %v189, %v189
    %v192 = vpack.c.b16 %v190, %v190
    %vm195 = vcmask 257024
    %196 = vst.msk [vmem:[%s6] sm:$0xf] %vm195, %v191
    %197 = vst.msk [vmem:[%s6 + $0x4] sm:$0xf] %vm195, %v192
  $region33: #{graph_encoder_forward.16} parent=0 // pred_fallthru
    _
  // Predicated region
  $region34: #{graph_encoder_forward.16} parent=0 // pred_check
    _
  $region35: #{graph_encoder_forward.16} parent=0 // pred_check_branch
    %199 = sbr.rel (0) target = $region37
  $region36: #{graph_encoder_forward.16} parent=0 // pred_region
    _
  $region37: #{graph_encoder_forward.16} parent=0 // pred_fallthru
    _
  // Predicated region
  $region38: #{graph_encoder_forward.16} parent=0 // pred_check
    _
  $region39: #{graph_encoder_forward.16} parent=0 // pred_check_branch
    %201 = sbr.rel (0) target = $region41
  $region40: #{graph_encoder_forward.16} parent=0 // pred_region
    _
  $region41: #{graph_encoder_forward.16} parent=0 // pred_fallthru
    _

</llo_original>
